<compile_context>
chip_gen: v7x
topology: tpu7x:2x2x1
jax: 0.10.0
libtpu: 0.0.40
codegen_flags: <defaults>
</compile_context>

<pallas_src>
import jax
import jax.numpy as jnp
from jax.experimental import pallas as pl
from jax.experimental.pallas import tpu as pltpu


def fusion_kernel(img_ref, td_ref, wimgx_ref, bimg_ref,
                  w1i_ref, w1td_ref, b1_ref, w2_ref, b2_ref,
                  out_ref, acc_ref):
    k = pl.program_id(1)
    tk = img_ref.shape[1]

    @pl.when(k == 0)
    def _init():
        acc_ref[...] = jnp.zeros_like(acc_ref)

    # Lane-dense K-tiled GEMM: pooling is folded into the contraction via the
    # pre-expanded (and 1/HW pre-scaled) img weight.  Only img moves per K
    # step; the weight is resident and sliced here.
    k0 = pl.multiple_of(k * tk, tk)
    w_blk = wimgx_ref[pl.ds(k0, tk), :]                       # (tk, E)
    acc_ref[...] += jnp.dot(img_ref[...], w_blk,
                            preferred_element_type=jnp.float32)

    @pl.when(k == pl.num_programs(1) - 1)
    def _finish():
        condensed = acc_ref[...] + bimg_ref[...]              # img_linear bias
        # BN(eval) already folded into w1/b1 offline; w1 split row-wise
        # replaces concat([condensed, text, dummy]) @ w1.
        h = (jnp.dot(condensed, w1i_ref[...],
                     preferred_element_type=jnp.float32)
             + jnp.dot(td_ref[...].astype(jnp.float32), w1td_ref[...],
                       preferred_element_type=jnp.float32)
             + b1_ref[...])
        h = jnp.maximum(h, 0.0)
        # TODO(synk): Dropout(p=0.2) is identity in eval mode; train-mode RNG
        # masking is intentionally not modeled here.
        out_ref[...] = (jnp.dot(h, w2_ref[...],
                                preferred_element_type=jnp.float32)
                        + b2_ref[...]).astype(out_ref.dtype)


def _round_up(x, m):
    return -(-x // m) * m


def _choose_tk(K, target):
    """Largest divisor of K that is <= target and a multiple of 128."""
    target = min(target, K)
    for tk in range(target, 127, -1):
        if K % tk == 0 and tk % 128 == 0:
            return tk
    return K  # no 128-multiple divisor: single K step (K becomes the full dim)


def fusion_forward(img_nchw, text, dummy, params, *, eps=1e-5,
                   img_dtype=None, tk_target=2048):
    B, C, H, W = img_nchw.shape
    HW = H * W
    K = C * HW

    E = params["w_img"].shape[1]
    D = params["w1"].shape[0]
    Hd = params["w2"].shape[1]
    assert D == 3 * E, "decoder_input_type == 3 layout expected"

    if img_dtype is None:
        img_dtype = img_nchw.dtype
    img_dtype = jnp.dtype(img_dtype)

    # ---- wrapper-side prep (cheap; the big tensor is only re-viewed) -------
    # Free view, no transpose / extra HBM pass: NCHW -> (B, C*HW).  Element
    # order is (c, hw), so expanded-weight row c*HW + hw holds w_img[c] / HW.
    # (In production pass img already in bf16 to avoid the cast pass.)
    img_flat = img_nchw.reshape(B, K).astype(img_dtype)
    w_img_x = jnp.repeat(params["w_img"].astype(jnp.float32) / HW, HW,
                         axis=0).astype(img_dtype)                  # (K, E)

    # Fold eval-mode BatchNorm1d into the bias-free first linear:
    #   BN(x) @ W1 = (x*scale + shift) @ W1 = x @ (scale[:,None]*W1) + shift@W1
    # NOTE: re-derive whenever running stats change (train/eval toggle).
    scale = params["gamma"] * jax.lax.rsqrt(params["var"] + eps)    # (1, D)
    shift = params["beta"] - params["mean"] * scale                 # (1, D)
    w1f = scale.reshape(D, 1) * params["w1"]                        # (D, D)
    b1f = shift.reshape(1, D) @ params["w1"]                        # (1, D)
    w1_img = w1f[:E]                                                # (E, D)
    w1_td = w1f[E:3 * E]                                            # (2E, D)

    # One small stream for [text | dummy] instead of two tiny ones.
    td = jnp.concatenate([text, dummy], axis=1).astype(jnp.float32)  # (B, 2E)

    # ---- tiling -------------------------------------------------------------
    tk = _choose_tk(K, tk_target)
    n_k = K // tk

    # Batch tile: big enough to amortize per-step overhead, split into >= 2
    # tiles when possible so both v7x TensorCores get work.  Padded rows of a
    # partial last tile are garbage but rows are independent and the padded
    # output rows are dropped — do NOT add cross-batch reductions in-kernel.
    if B > 128:
        TB = 128
    elif B >= 16:
        TB = _round_up(-(-B // 2), 8)
    else:
        TB = B
    n_b = pl.cdiv(B, TB)

    bk_map = lambda i, k: (i, k)
    b_map = lambda i, k: (i, 0)
    const_map = lambda i, k: (0, 0)      # resident across grid steps

    in_specs = [
        pl.BlockSpec((TB, tk), bk_map),        # img (lane-dense K tiles)
        pl.BlockSpec((TB, 2 * E), b_map),      # [text | dummy]
        pl.BlockSpec((K, E), const_map),       # expanded img weight (resident)
        pl.BlockSpec((1, E), const_map),       # b_img
        pl.BlockSpec((E, D), const_map),       # w1 rows for condensed (BN folded)
        pl.BlockSpec((2 * E, D), const_map),   # w1 rows for text+dummy (BN folded)
        pl.BlockSpec((1, D), const_map),       # b1 (BN shift folded through w1)
        pl.BlockSpec((D, Hd), const_map),      # w2
        pl.BlockSpec((1, Hd), const_map),      # b2
    ]
    out_specs = pl.BlockSpec((TB, Hd), b_map)

    # ---- VMEM budget (padded to the (8,128) VMEM tiling), capped for v7x ----
    def _pad_bytes(r, c, itemsize):
        return _round_up(max(r, 1), 8) * _round_up(max(c, 1), 128) * itemsize

    it_img = img_dtype.itemsize
    est = (2 * _pad_bytes(K, E, it_img)            # resident weight (dbl-buffered)
           + 2 * _pad_bytes(TB, tk, it_img)        # img block
           + 2 * _pad_bytes(TB, 2 * E, 4)          # td block
           + 2 * (_pad_bytes(1, E, 4) + _pad_bytes(E, D, 4)
                  + _pad_bytes(2 * E, D, 4) + _pad_bytes(1, D, 4)
                  + _pad_bytes(D, Hd, 4) + _pad_bytes(1, Hd, 4))
           + 2 * _pad_bytes(TB, Hd, 4)             # out block
           + _pad_bytes(TB, E, 4)                  # f32 accumulator scratch
           + (4 << 20))                            # compiler-internal slack
    vmem_limit = int(max(est, 20 << 20))
    if est <= (40 << 20):                          # keep inside v7x comfort zone
        vmem_limit = min(vmem_limit, 40 << 20)

    flops = (2 * B * K * E            # img GEMM (pooling folded in)
             + 2 * B * E * D + 2 * B * (2 * E) * D
             + 2 * B * D * Hd)
    small_param_bytes = 4 * (E + E * D + 2 * E * D + D + D * Hd + Hd)
    bytes_accessed = (img_flat.size * img_flat.dtype.itemsize
                      + w_img_x.size * w_img_x.dtype.itemsize
                      + td.size * 4 + B * Hd * 4 + small_param_bytes)

    return pl.pallas_call(
        fusion_kernel,
        out_shape=jax.ShapeDtypeStruct((B, Hd), jnp.float32),
        grid=(n_b, n_k),
        in_specs=in_specs,
        out_specs=out_specs,
        scratch_shapes=[pltpu.VMEM((TB, E), jnp.float32)],
        compiler_params=pltpu.CompilerParams(
            dimension_semantics=("parallel", "arbitrary"),
            vmem_limit_bytes=vmem_limit),
        cost_estimate=pl.CostEstimate(
            flops=flops, transcendentals=0, bytes_accessed=bytes_accessed),
    )(img_flat, td, w_img_x, params["b_img"], w1_img, w1_td, b1f,
      params["w2"], params["b2"])


def reference_forward(img_nchw, text, dummy, params):
    B, C, H, W = img_nchw.shape
    pooled = jnp.mean(img_nchw.reshape(B, C, H * W), axis=-1)
    condensed = pooled @ params["w_img"] + params["b_img"]
    feats = jnp.concatenate([condensed, text, dummy], axis=1)
    x = (feats - params["mean"]) * jax.lax.rsqrt(params["var"] + 1e-5)
    x = x * params["gamma"] + params["beta"]
    h = jnp.maximum(x @ params["w1"], 0.0)
    return h @ params["w2"] + params["b2"]


if __name__ == "__main__":
    # Small shapes consistent with the module's forward.
    B = 2
    C_IMG = 2048            # img_linear expects 2048 input features
    H = W = 4
    embedding_dim = 32
    hidden_dim = 32
    input_type = 3
    D = embedding_dim * max(input_type, 2)   # 96

    key = jax.random.PRNGKey(0)
    ks = jax.random.split(key, 12)
    f32 = jnp.float32

    img = jax.random.normal(ks[0], (B, C_IMG, H, W), dtype=f32)
    text = jax.random.normal(ks[1], (B, embedding_dim), dtype=f32)
    dummy = jax.random.normal(ks[2], (B, embedding_dim), dtype=f32)

    params = {
        # img_linear: weight stored pre-transposed as (2048, E); bias (1, E)
        "w_img": jax.random.normal(ks[3], (C_IMG, embedding_dim), dtype=f32) * 0.02,
        "b_img": jax.random.normal(ks[4], (1, embedding_dim), dtype=f32) * 0.02,
        # BatchNorm1d(D) affine + running stats (deterministic synthetic init)
        "gamma": 1.0 + 0.1 * jax.random.normal(ks[5], (1, D), dtype=f32),
        "beta": 0.1 * jax.random.normal(ks[6], (1, D), dtype=f32),
        "mean": 0.1 * jax.random.normal(ks[7], (1, D), dtype=f32),
        "var": 1.0 + 0.1 * jax.random.uniform(ks[8], (1, D), dtype=f32),
        # Linear(D, D, bias=False): (D, D) pre-transposed
        "w1": jax.random.normal(ks[9], (D, D), dtype=f32) * 0.05,
        # Linear(D, hidden_dim): (D, Hd) pre-transposed, bias (1, Hd)
        "w2": jax.random.normal(ks[10], (D, hidden_dim), dtype=f32) * 0.05,
        "b2": jax.random.normal(ks[11], (1, hidden_dim), dtype=f32) * 0.02,
    }

    ref = reference_forward(img, text, dummy, params)

    # f32 img stream: tight check against the pure-JAX reference.
    out = fusion_forward(img, text, dummy, params)
    out = jax.block_until_ready(out)
    assert out.shape == (B, hidden_dim)
    assert jnp.allclose(out, ref, atol=1e-4, rtol=1e-4), "f32 mismatch vs reference"

    # bf16 img stream (MXU-only bf16, f32 accumulation): loose check.
    out_bf16 = fusion_forward(img, text, dummy, params, img_dtype=jnp.bfloat16)
    out_bf16 = jax.block_until_ready(out_bf16)
    assert jnp.allclose(out_bf16, ref, atol=5e-2, rtol=5e-2), "bf16 mismatch vs reference"

    print("KERNEL_OK")
</pallas_src>

<mosaic_0001>
module attributes {stable_mosaic.version = 11 : i64} {
  func.func @fusion_kernel(%arg0: i32, %arg1: i32, %arg2: memref<2x2048xf32, #tpu.memory_space<vmem>>, %arg3: memref<2x64xf32, #tpu.memory_space<vmem>>, %arg4: memref<32768x32xf32, #tpu.memory_space<vmem>>, %arg5: memref<1x32xf32, #tpu.memory_space<vmem>>, %arg6: memref<32x96xf32, #tpu.memory_space<vmem>>, %arg7: memref<64x96xf32, #tpu.memory_space<vmem>>, %arg8: memref<1x96xf32, #tpu.memory_space<vmem>>, %arg9: memref<96x32xf32, #tpu.memory_space<vmem>>, %arg10: memref<1x32xf32, #tpu.memory_space<vmem>>, %arg11: memref<2x32xf32, #tpu.memory_space<vmem>>, %arg12: memref<2x32xf32, #tpu.memory_space<vmem>>) attributes {dimension_semantics = [#tpu.dimension_semantics<parallel>, #tpu.dimension_semantics<arbitrary>], iteration_bounds = array<i64: 1, 16>, scalar_prefetch = 0 : i64, scratch_operands = 1 : i64, tpu.core_type = #tpu.core_type<tc>, window_params = [{transform_indices = @transform_0, window_bounds = array<i64: 2, 2048>}, {transform_indices = @transform_1, window_bounds = array<i64: 2, 64>}, {pipeline_mode = #tpu.pipeline_mode<synchronous>, transform_indices = @transform_2, window_bounds = array<i64: 32768, 32>}, {pipeline_mode = #tpu.pipeline_mode<synchronous>, transform_indices = @transform_3, window_bounds = array<i64: 1, 32>}, {pipeline_mode = #tpu.pipeline_mode<synchronous>, transform_indices = @transform_4, window_bounds = array<i64: 32, 96>}, {pipeline_mode = #tpu.pipeline_mode<synchronous>, transform_indices = @transform_5, window_bounds = array<i64: 64, 96>}, {pipeline_mode = #tpu.pipeline_mode<synchronous>, transform_indices = @transform_6, window_bounds = array<i64: 1, 96>}, {pipeline_mode = #tpu.pipeline_mode<synchronous>, transform_indices = @transform_7, window_bounds = array<i64: 96, 32>}, {pipeline_mode = #tpu.pipeline_mode<synchronous>, transform_indices = @transform_8, window_bounds = array<i64: 1, 32>}, {transform_indices = @transform_9, window_bounds = array<i64: 2, 32>}]} {
    %c0_i32 = arith.constant 0 : i32
    %0 = arith.cmpi eq, %arg1, %c0_i32 : i32
    %1 = arith.extui %0 : i1 to i32
    %c0_i32_0 = arith.constant 0 : i32
    %2 = arith.cmpi ne, %1, %c0_i32_0 : i32
    scf.if %2 {
      %cst_8 = arith.constant 0.000000e+00 : f32
      %15 = vector.broadcast %cst_8 : f32 to vector<2x32xf32>
      %c0_9 = arith.constant 0 : index
      %c0_10 = arith.constant 0 : index
      %16 = vector.load %arg12[%c0_9, %c0_10] : memref<2x32xf32, #tpu.memory_space<vmem>>, vector<2x32xf32>
      tpu.vector_store %arg12[%c0_9, %c0_10], %15 {strides = array<i32>} : memref<2x32xf32, #tpu.memory_space<vmem>>, vector<2x32xf32>,
    } else {
    }
    %c2048_i32 = arith.constant 2048 : i32
    %3 = arith.muli %arg1, %c2048_i32 : i32
    %4 = tpu.assume_multiple %3, 2048 : i32
    %5 = arith.index_cast %4 : i32 to index
    %c0 = arith.constant 0 : index
    %6 = vector.load %arg4[%5, %c0] : memref<32768x32xf32, #tpu.memory_space<vmem>>, vector<2048x32xf32>
    %c0_1 = arith.constant 0 : index
    %c0_2 = arith.constant 0 : index
    %7 = vector.load %arg12[%c0_1, %c0_2] : memref<2x32xf32, #tpu.memory_space<vmem>>, vector<2x32xf32>
    %c0_3 = arith.constant 0 : index
    %c0_4 = arith.constant 0 : index
    %8 = vector.load %arg2[%c0_3, %c0_4] : memref<2x2048xf32, #tpu.memory_space<vmem>>, vector<2x2048xf32>
    %cst = arith.constant dense<0.000000e+00> : vector<2x32xf32>
    %9 = tpu.matmul %8, %6, %cst {dimension_numbers = #tpu.dot_dimension_numbers<[1], [0], [0], [1], [0, 0, 1, 1], [], []>} : vector<2x2048xf32>, vector<2048x32xf32>, vector<2x32xf32> -> vector<2x32xf32>
    %10 = arith.addf %7, %9 : vector<2x32xf32>
    %c0_5 = arith.constant 0 : index
    %c0_6 = arith.constant 0 : index
    %11 = vector.load %arg12[%c0_5, %c0_6] : memref<2x32xf32, #tpu.memory_space<vmem>>, vector<2x32xf32>
    tpu.vector_store %arg12[%c0_5, %c0_6], %10 {strides = array<i32>} : memref<2x32xf32, #tpu.memory_space<vmem>>, vector<2x32xf32>,
    %c15_i32 = arith.constant 15 : i32
    %12 = arith.cmpi eq, %arg1, %c15_i32 : i32
    %13 = arith.extui %12 : i1 to i32
    %c0_i32_7 = arith.constant 0 : i32
    %14 = arith.cmpi ne, %13, %c0_i32_7 : i32
    scf.if %14 {
      %c0_8 = arith.constant 0 : index
      %c0_9 = arith.constant 0 : index
      %15 = vector.load %arg12[%c0_8, %c0_9] : memref<2x32xf32, #tpu.memory_space<vmem>>, vector<2x32xf32>
      %c0_10 = arith.constant 0 : index
      %c0_11 = arith.constant 0 : index
      %16 = vector.load %arg5[%c0_10, %c0_11] : memref<1x32xf32, #tpu.memory_space<vmem>>, vector<1x32xf32>
      %17 = vector.broadcast %16 : vector<1x32xf32> to vector<2x32xf32>
      %18 = arith.addf %15, %17 : vector<2x32xf32>
      %c0_12 = arith.constant 0 : index
      %c0_13 = arith.constant 0 : index
      %19 = vector.load %arg6[%c0_12, %c0_13] : memref<32x96xf32, #tpu.memory_space<vmem>>, vector<32x96xf32>
      %cst_14 = arith.constant dense<0.000000e+00> : vector<2x96xf32>
      %20 = tpu.matmul %18, %19, %cst_14 {dimension_numbers = #tpu.dot_dimension_numbers<[1], [0], [0], [1], [0, 0, 1, 1], [], []>} : vector<2x32xf32>, vector<32x96xf32>, vector<2x96xf32> -> vector<2x96xf32>
      %c0_15 = arith.constant 0 : index
      %c0_16 = arith.constant 0 : index
      %21 = vector.load %arg3[%c0_15, %c0_16] : memref<2x64xf32, #tpu.memory_space<vmem>>, vector<2x64xf32>
      %c0_17 = arith.constant 0 : index
      %c0_18 = arith.constant 0 : index
      %22 = vector.load %arg7[%c0_17, %c0_18] : memref<64x96xf32, #tpu.memory_space<vmem>>, vector<64x96xf32>
      %cst_19 = arith.constant dense<0.000000e+00> : vector<2x96xf32>
      %23 = tpu.matmul %21, %22, %cst_19 {dimension_numbers = #tpu.dot_dimension_numbers<[1], [0], [0], [1], [0, 0, 1, 1], [], []>} : vector<2x64xf32>, vector<64x96xf32>, vector<2x96xf32> -> vector<2x96xf32>
      %24 = arith.addf %20, %23 : vector<2x96xf32>
      %c0_20 = arith.constant 0 : index
      %c0_21 = arith.constant 0 : index
      %25 = vector.load %arg8[%c0_20, %c0_21] : memref<1x96xf32, #tpu.memory_space<vmem>>, vector<1x96xf32>
      %26 = vector.broadcast %25 : vector<1x96xf32> to vector<2x96xf32>
      %27 = arith.addf %24, %26 : vector<2x96xf32>
      %cst_22 = arith.constant 0.000000e+00 : f32
      %28 = vector.broadcast %cst_22 : f32 to vector<2x96xf32>
      %29 = arith.maximumf %27, %28 : vector<2x96xf32>
      %c0_23 = arith.constant 0 : index
      %c0_24 = arith.constant 0 : index
      %30 = vector.load %arg9[%c0_23, %c0_24] : memref<96x32xf32, #tpu.memory_space<vmem>>, vector<96x32xf32>
      %cst_25 = arith.constant dense<0.000000e+00> : vector<2x32xf32>
      %31 = tpu.matmul %29, %30, %cst_25 {dimension_numbers = #tpu.dot_dimension_numbers<[1], [0], [0], [1], [0, 0, 1, 1], [], []>} : vector<2x96xf32>, vector<96x32xf32>, vector<2x32xf32> -> vector<2x32xf32>
      %c0_26 = arith.constant 0 : index
      %c0_27 = arith.constant 0 : index
      %32 = vector.load %arg10[%c0_26, %c0_27] : memref<1x32xf32, #tpu.memory_space<vmem>>, vector<1x32xf32>
      %33 = vector.broadcast %32 : vector<1x32xf32> to vector<2x32xf32>
      %34 = arith.addf %31, %33 : vector<2x32xf32>
      %c0_28 = arith.constant 0 : index
      %c0_29 = arith.constant 0 : index
      %35 = vector.load %arg11[%c0_28, %c0_29] : memref<2x32xf32, #tpu.memory_space<vmem>>, vector<2x32xf32>
      tpu.vector_store %arg11[%c0_28, %c0_29], %34 {strides = array<i32>} : memref<2x32xf32, #tpu.memory_space<vmem>>, vector<2x32xf32>,
    } else {
    }
    return
  }
  func.func @transform_0(%arg0: i32, %arg1: i32) -> (i32, i32) {
    %c0_i32 = arith.constant 0 : i32
    return %arg0, %arg1 : i32, i32
  }
  func.func @transform_1(%arg0: i32, %arg1: i32) -> (i32, i32) {
    %c0_i32 = arith.constant 0 : i32
    %c0_i32_0 = arith.constant 0 : i32
    return %arg0, %c0_i32 : i32, i32
  }
  func.func @transform_2(%arg0: i32, %arg1: i32) -> (i32, i32) {
    %c0_i32 = arith.constant 0 : i32
    %c0_i32_0 = arith.constant 0 : i32
    %c0_i32_1 = arith.constant 0 : i32
    return %c0_i32, %c0_i32_0 : i32, i32
  }
  func.func @transform_3(%arg0: i32, %arg1: i32) -> (i32, i32) {
    %c0_i32 = arith.constant 0 : i32
    %c0_i32_0 = arith.constant 0 : i32
    %c0_i32_1 = arith.constant 0 : i32
    return %c0_i32, %c0_i32_0 : i32, i32
  }
  func.func @transform_4(%arg0: i32, %arg1: i32) -> (i32, i32) {
    %c0_i32 = arith.constant 0 : i32
    %c0_i32_0 = arith.constant 0 : i32
    %c0_i32_1 = arith.constant 0 : i32
    return %c0_i32, %c0_i32_0 : i32, i32
  }
  func.func @transform_5(%arg0: i32, %arg1: i32) -> (i32, i32) {
    %c0_i32 = arith.constant 0 : i32
    %c0_i32_0 = arith.constant 0 : i32
    %c0_i32_1 = arith.constant 0 : i32
    return %c0_i32, %c0_i32_0 : i32, i32
  }
  func.func @transform_6(%arg0: i32, %arg1: i32) -> (i32, i32) {
    %c0_i32 = arith.constant 0 : i32
    %c0_i32_0 = arith.constant 0 : i32
    %c0_i32_1 = arith.constant 0 : i32
    return %c0_i32, %c0_i32_0 : i32, i32
  }
  func.func @transform_7(%arg0: i32, %arg1: i32) -> (i32, i32) {
    %c0_i32 = arith.constant 0 : i32
    %c0_i32_0 = arith.constant 0 : i32
    %c0_i32_1 = arith.constant 0 : i32
    return %c0_i32, %c0_i32_0 : i32, i32
  }
  func.func @transform_8(%arg0: i32, %arg1: i32) -> (i32, i32) {
    %c0_i32 = arith.constant 0 : i32
    %c0_i32_0 = arith.constant 0 : i32
    %c0_i32_1 = arith.constant 0 : i32
    return %c0_i32, %c0_i32_0 : i32, i32
  }
  func.func @transform_9(%arg0: i32, %arg1: i32) -> (i32, i32) {
    %c0_i32 = arith.constant 0 : i32
    %c0_i32_0 = arith.constant 0 : i32
    return %arg0, %c0_i32 : i32, i32
  }
}

</mosaic_0001>

<llo_original>
// kernel: tpu_custom_call.1
$region0: #{tpu_custom_call.1}
  #allocation0 [shape = 'u32[]', space=smem, size = 0x4, offset = 0x4, fixed_abs, tag = 'smem constant byte address 0x4 - core index']
  #allocation1 [shape = 'u32[144,128]{1,0:T(1,128)}', space=vmem, size = 0x12000, scoped, tag = 'internal scratch']
  #allocation2 [shape = 'f32[2,32]{1,0:T(2,128)}', space=vmem, size = 0x400, scoped, tag = 'scratch operand']
  %s0 = inlined_call_operand.vmem [shape: f32[2,32768], index: 0, kind: input, shape index: {}]
  %s1 = inlined_call_operand.vmem [shape: f32[2,64], index: 1, kind: input, shape index: {}]
  %s2 = inlined_call_operand.vmem [shape: f32[32768,32], index: 2, kind: input, shape index: {}]
  %s3 = inlined_call_operand.vmem [shape: f32[1,32], index: 3, kind: input, shape index: {}]
  %s4 = inlined_call_operand.vmem [shape: f32[32,96], index: 4, kind: input, shape index: {}]
  %s5 = inlined_call_operand.vmem [shape: f32[64,96], index: 5, kind: input, shape index: {}]
  %s6 = inlined_call_operand.vmem [shape: f32[1,96], index: 6, kind: input, shape index: {}]
  %s7 = inlined_call_operand.vmem [shape: f32[96,32], index: 7, kind: input, shape index: {}]
  %s8 = inlined_call_operand.vmem [shape: f32[1,32], index: 8, kind: input, shape index: {}]
  %s9 = inlined_call_operand.hbm [shape: f32[2,32], index: 9, kind: output, shape index: {}]
  %s10 = sld [smem:[#allocation0]]
  $region77: #{tpu_custom_call.1} parent=0
    _
  %s12 = ssub.s32 1, %s10
  %s13 = scalar_select 0, %s12, %s10
  $region1: #{tpu_custom_call.1} parent=0
    #allocation3 [shape = 'u8[1024]{0}', space=vmem, size = 0x400, scoped, tag = 'output window, operand 0, single buffered']
    #allocation4 [shape = 's32[2]{0}', space=sflag, size = 0x8, scoped, tag = 'scoped memory for tpu_custom_call.1']
    %14 = vsyncpa [#allocation4], 0
    loop: start=0, step=1, limit=18
    $region2: #{tpu_custom_call.1} parent=1 // loop_pre_header
      _
    $region3: #{tpu_custom_call.1} parent=1 // loop_header
      %s16 = sphi 0, %s20
      %p17 = scmp.ge.s32.totalorder %s16, 18
      %s23 = sphi 0, %s35
      %s24 = sphi 0, %s31
      %s25 = sphi 0, %s23
      %s26 = sphi 0, %s24
      %s27 = sphi 0, %s25
      %s28 = sphi 0, %s26
      %s40 = sphi 0, %s42
      %s43 = sphi 0, %s40
      %s44 = sphi 0, %s43
      %s60 = sphi 0, %s44
      %s66 = sphi 0, %s68
      %s69 = sphi 0, %s66
      %s70 = sphi 0, %s69
      %s86 = sphi 0, %s70
      %s90 = sphi 0, %s90
      %s92 = sphi 0, %s90
      %s93 = sphi 0, %s92
      %s107 = sphi 0, %s93
      %s111 = sphi 0, %s111
      %s113 = sphi 0, %s111
      %s114 = sphi 0, %s113
      %s128 = sphi 0, %s114
      %s132 = sphi 0, %s132
      %s134 = sphi 0, %s132
      %s135 = sphi 0, %s134
      %s149 = sphi 0, %s135
      %s153 = sphi 0, %s153
      %s155 = sphi 0, %s153
      %s156 = sphi 0, %s155
      %s170 = sphi 0, %s156
      %s174 = sphi 0, %s174
      %s176 = sphi 0, %s174
      %s177 = sphi 0, %s176
      %s191 = sphi 0, %s177
      %s195 = sphi 0, %s195
      %s197 = sphi 0, %s195
      %s198 = sphi 0, %s197
      %s212 = sphi 0, %s198
      %s216 = sphi 0, %s216
      %s218 = sphi 0, %s216
      %s219 = sphi 0, %s218
      %s233 = sphi 0, %s219
      %s239 = sphi 0, %s241
      %s242 = sphi 0, %s239
      %s243 = sphi 0, %s242
      %s259 = sphi 0, %s243
    $region4: #{tpu_custom_call.1} parent=1 // loop_header_branch
      %19 = sbr.rel (%p17) target = $region8
    $region5: #{tpu_custom_call.1} parent=1 // loop_body
      %s21 = ssub.s32 %s16, 1
      %s22 = ssub.s32 %s16, 2
      %s29 = sadd.s32 1, %s24
      %p30 = scmp.ge.s32.totalorder %s29, 16
      %s31 = scalar_select %p30, 0, %s29
      %s32 = sadd.s32 1, %s23
      %s33 = scalar_select %p30, %s32, %s23
      %p34 = scmp.ge.s32.totalorder %s33, 1
      %s35 = scalar_select %p34, 0, %s33
      %s36 = ssub.s32 %s23, %s35
      %s37 = ssub.s32 %s24, %s31
      %s38 = sor.u32 %s36, %s37
      %p39 = scmp.eq.s32.totalorder %s38, 0
      %s41 = sadd.s32 %s40, 1
      %s42 = scalar_select %p39, %s40, %s41
      %p45 = pneg %p39
      %p46 = scmp.eq.s32.totalorder %s16, 15
      %p47 = por %p45, %p46
      %p48 = scmp.ne.s32.totalorder %s40, %s43
      %p49 = scmp.eq.s32.totalorder %s16, 0
      %p50 = por %p48, %p49
      %p51 = scmp.ne.s32.totalorder %s40, %s43
      %p52 = scmp.eq.s32.totalorder %s21, 15
      %p53 = por %p51, %p52
      %p54 = scmp.ne.s32.totalorder %s43, %s44
      %p55 = scmp.eq.s32.totalorder %s21, 0
      %p56 = por %p54, %p55
      %p57 = scmp.ne.s32.totalorder %s43, %s44
      %p58 = scmp.eq.s32.totalorder %s22, 15
      %p59 = por %p57, %p58
      %p61 = scmp.ne.s32.totalorder %s44, %s60
      %p62 = scmp.eq.s32.totalorder %s22, 0
      %p63 = por %p61, %p62
      %s64 = ssub.s32 %s23, %s35
      %p65 = scmp.eq.s32.totalorder %s64, 0
      %s67 = sadd.s32 %s66, 1
      %s68 = scalar_select %p65, %s66, %s67
      %p71 = pneg %p65
      %p72 = scmp.eq.s32.totalorder %s16, 15
      %p73 = por %p71, %p72
      %p74 = scmp.ne.s32.totalorder %s66, %s69
      %p75 = scmp.eq.s32.totalorder %s16, 0
      %p76 = por %p74, %p75
      %p77 = scmp.ne.s32.totalorder %s66, %s69
      %p78 = scmp.eq.s32.totalorder %s21, 15
      %p79 = por %p77, %p78
      %p80 = scmp.ne.s32.totalorder %s69, %s70
      %p81 = scmp.eq.s32.totalorder %s21, 0
      %p82 = por %p80, %p81
      %p83 = scmp.ne.s32.totalorder %s69, %s70
      %p84 = scmp.eq.s32.totalorder %s22, 15
      %p85 = por %p83, %p84
      %p87 = scmp.ne.s32.totalorder %s70, %s86
      %p88 = scmp.eq.s32.totalorder %s22, 0
      %p89 = por %p87, %p88
      %s91 = sadd.s32 %s90, 1
      %p94 = scmp.eq.s32.totalorder %s16, 15
      %p95 = scmp.ne.s32.totalorder %s90, %s92
      %p96 = scmp.eq.s32.totalorder %s16, 0
      %p97 = por %p95, %p96
      %p98 = scmp.ne.s32.totalorder %s90, %s92
      %p99 = scmp.eq.s32.totalorder %s21, 15
      %p100 = por %p98, %p99
      %p101 = scmp.ne.s32.totalorder %s92, %s93
      %p102 = scmp.eq.s32.totalorder %s21, 0
      %p103 = por %p101, %p102
      %p104 = scmp.ne.s32.totalorder %s92, %s93
      %p105 = scmp.eq.s32.totalorder %s22, 15
      %p106 = por %p104, %p105
      %p108 = scmp.ne.s32.totalorder %s93, %s107
      %p109 = scmp.eq.s32.totalorder %s22, 0
      %p110 = por %p108, %p109
      %s112 = sadd.s32 %s111, 1
      %p115 = scmp.eq.s32.totalorder %s16, 15
      %p116 = scmp.ne.s32.totalorder %s111, %s113
      %p117 = scmp.eq.s32.totalorder %s16, 0
      %p118 = por %p116, %p117
      %p119 = scmp.ne.s32.totalorder %s111, %s113
      %p120 = scmp.eq.s32.totalorder %s21, 15
      %p121 = por %p119, %p120
      %p122 = scmp.ne.s32.totalorder %s113, %s114
      %p123 = scmp.eq.s32.totalorder %s21, 0
      %p124 = por %p122, %p123
      %p125 = scmp.ne.s32.totalorder %s113, %s114
      %p126 = scmp.eq.s32.totalorder %s22, 15
      %p127 = por %p125, %p126
      %p129 = scmp.ne.s32.totalorder %s114, %s128
      %p130 = scmp.eq.s32.totalorder %s22, 0
      %p131 = por %p129, %p130
      %s133 = sadd.s32 %s132, 1
      %p136 = scmp.eq.s32.totalorder %s16, 15
      %p137 = scmp.ne.s32.totalorder %s132, %s134
      %p138 = scmp.eq.s32.totalorder %s16, 0
      %p139 = por %p137, %p138
      %p140 = scmp.ne.s32.totalorder %s132, %s134
      %p141 = scmp.eq.s32.totalorder %s21, 15
      %p142 = por %p140, %p141
      %p143 = scmp.ne.s32.totalorder %s134, %s135
      %p144 = scmp.eq.s32.totalorder %s21, 0
      %p145 = por %p143, %p144
      %p146 = scmp.ne.s32.totalorder %s134, %s135
      %p147 = scmp.eq.s32.totalorder %s22, 15
      %p148 = por %p146, %p147
      %p150 = scmp.ne.s32.totalorder %s135, %s149
      %p151 = scmp.eq.s32.totalorder %s22, 0
      %p152 = por %p150, %p151
      %s154 = sadd.s32 %s153, 1
      %p157 = scmp.eq.s32.totalorder %s16, 15
      %p158 = scmp.ne.s32.totalorder %s153, %s155
      %p159 = scmp.eq.s32.totalorder %s16, 0
      %p160 = por %p158, %p159
      %p161 = scmp.ne.s32.totalorder %s153, %s155
      %p162 = scmp.eq.s32.totalorder %s21, 15
      %p163 = por %p161, %p162
      %p164 = scmp.ne.s32.totalorder %s155, %s156
      %p165 = scmp.eq.s32.totalorder %s21, 0
      %p166 = por %p164, %p165
      %p167 = scmp.ne.s32.totalorder %s155, %s156
      %p168 = scmp.eq.s32.totalorder %s22, 15
      %p169 = por %p167, %p168
      %p171 = scmp.ne.s32.totalorder %s156, %s170
      %p172 = scmp.eq.s32.totalorder %s22, 0
      %p173 = por %p171, %p172
      %s175 = sadd.s32 %s174, 1
      %p178 = scmp.eq.s32.totalorder %s16, 15
      %p179 = scmp.ne.s32.totalorder %s174, %s176
      %p180 = scmp.eq.s32.totalorder %s16, 0
      %p181 = por %p179, %p180
      %p182 = scmp.ne.s32.totalorder %s174, %s176
      %p183 = scmp.eq.s32.totalorder %s21, 15
      %p184 = por %p182, %p183
      %p185 = scmp.ne.s32.totalorder %s176, %s177
      %p186 = scmp.eq.s32.totalorder %s21, 0
      %p187 = por %p185, %p186
      %p188 = scmp.ne.s32.totalorder %s176, %s177
      %p189 = scmp.eq.s32.totalorder %s22, 15
      %p190 = por %p188, %p189
      %p192 = scmp.ne.s32.totalorder %s177, %s191
      %p193 = scmp.eq.s32.totalorder %s22, 0
      %p194 = por %p192, %p193
      %s196 = sadd.s32 %s195, 1
      %p199 = scmp.eq.s32.totalorder %s16, 15
      %p200 = scmp.ne.s32.totalorder %s195, %s197
      %p201 = scmp.eq.s32.totalorder %s16, 0
      %p202 = por %p200, %p201
      %p203 = scmp.ne.s32.totalorder %s195, %s197
      %p204 = scmp.eq.s32.totalorder %s21, 15
      %p205 = por %p203, %p204
      %p206 = scmp.ne.s32.totalorder %s197, %s198
      %p207 = scmp.eq.s32.totalorder %s21, 0
      %p208 = por %p206, %p207
      %p209 = scmp.ne.s32.totalorder %s197, %s198
      %p210 = scmp.eq.s32.totalorder %s22, 15
      %p211 = por %p209, %p210
      %p213 = scmp.ne.s32.totalorder %s198, %s212
      %p214 = scmp.eq.s32.totalorder %s22, 0
      %p215 = por %p213, %p214
      %s217 = sadd.s32 %s216, 1
      %p220 = scmp.eq.s32.totalorder %s16, 15
      %p221 = scmp.ne.s32.totalorder %s216, %s218
      %p222 = scmp.eq.s32.totalorder %s16, 0
      %p223 = por %p221, %p222
      %p224 = scmp.ne.s32.totalorder %s216, %s218
      %p225 = scmp.eq.s32.totalorder %s21, 15
      %p226 = por %p224, %p225
      %p227 = scmp.ne.s32.totalorder %s218, %s219
      %p228 = scmp.eq.s32.totalorder %s21, 0
      %p229 = por %p227, %p228
      %p230 = scmp.ne.s32.totalorder %s218, %s219
      %p231 = scmp.eq.s32.totalorder %s22, 15
      %p232 = por %p230, %p231
      %p234 = scmp.ne.s32.totalorder %s219, %s233
      %p235 = scmp.eq.s32.totalorder %s22, 0
      %p236 = por %p234, %p235
      %s237 = ssub.s32 %s23, %s35
      %p238 = scmp.eq.s32.totalorder %s237, 0
      %s240 = sadd.s32 %s239, 1
      %s241 = scalar_select %p238, %s239, %s240
      %p244 = pneg %p238
      %p245 = scmp.eq.s32.totalorder %s16, 15
      %p246 = por %p244, %p245
      %p247 = scmp.ne.s32.totalorder %s239, %s242
      %p248 = scmp.eq.s32.totalorder %s16, 0
      %p249 = por %p247, %p248
      %p250 = scmp.ne.s32.totalorder %s239, %s242
      %p251 = scmp.eq.s32.totalorder %s21, 15
      %p252 = por %p250, %p251
      %p253 = scmp.ne.s32.totalorder %s242, %s243
      %p254 = scmp.eq.s32.totalorder %s21, 0
      %p255 = por %p253, %p254
      %p256 = scmp.ne.s32.totalorder %s242, %s243
      %p257 = scmp.eq.s32.totalorder %s22, 15
      %p258 = por %p256, %p257
      %p260 = scmp.ne.s32.totalorder %s243, %s259
      %p261 = scmp.eq.s32.totalorder %s22, 0
      %p262 = por %p260, %p261
      %p263 = scmp.le.s32.totalorder 1, %s16
      %p264 = scmp.lt.s32.totalorder %s16, 17
      %p265 = pnand %p263, %p264
      %p266 = pneg %p265
      // Predicated region
      $region9: #{tpu_custom_call.1} parent=5 // pred_check
        _
      $region10: #{tpu_custom_call.1} parent=5 // pred_check_branch
        %268 = sbr.rel (%p265) target = $region12
      $region11: #{tpu_custom_call.1} parent=5 // pred_region
        %s269 = ssub.s32 %s16, 1
        // Predicated region
        $region13: #{tpu_custom_call.1} parent=11 // pred_check
          %p270 = pneg %p82
        $region14: #{tpu_custom_call.1} parent=11 // pred_check_branch
          %272 = sbr.rel (%p270) target = $region16
        $region15: #{tpu_custom_call.1} parent=11 // pred_region
          %p273 = scmp.lt.s32.totalorder %s25, 0
          %s274 = scalar_select %p273, %s25, 0
          %s275 = smul.addr %s274, 2
          %s276 = scalar_lea.vmem %s1, %s275
        $region16: #{tpu_custom_call.1} parent=11 // pred_fallthru
          _
        // Predicated region
        $region17: #{tpu_custom_call.1} parent=11 // pred_check
          %p277 = pneg %p103
        $region18: #{tpu_custom_call.1} parent=11 // pred_check_branch
          %279 = sbr.rel (%p277) target = $region20
        $region19: #{tpu_custom_call.1} parent=11 // pred_region
          _
        $region20: #{tpu_custom_call.1} parent=11 // pred_fallthru
          _
        // Predicated region
        $region21: #{tpu_custom_call.1} parent=11 // pred_check
          %p280 = pneg %p124
        $region22: #{tpu_custom_call.1} parent=11 // pred_check_branch
          %282 = sbr.rel (%p280) target = $region24
        $region23: #{tpu_custom_call.1} parent=11 // pred_region
          _
        $region24: #{tpu_custom_call.1} parent=11 // pred_fallthru
          _
        // Predicated region
        $region25: #{tpu_custom_call.1} parent=11 // pred_check
          %p283 = pneg %p145
        $region26: #{tpu_custom_call.1} parent=11 // pred_check_branch
          %285 = sbr.rel (%p283) target = $region28
        $region27: #{tpu_custom_call.1} parent=11 // pred_region
          _
        $region28: #{tpu_custom_call.1} parent=11 // pred_fallthru
          _
        // Predicated region
        $region29: #{tpu_custom_call.1} parent=11 // pred_check
          %p286 = pneg %p166
        $region30: #{tpu_custom_call.1} parent=11 // pred_check_branch
          %288 = sbr.rel (%p286) target = $region32
        $region31: #{tpu_custom_call.1} parent=11 // pred_region
          _
        $region32: #{tpu_custom_call.1} parent=11 // pred_fallthru
          _
        // Predicated region
        $region33: #{tpu_custom_call.1} parent=11 // pred_check
          %p289 = pneg %p187
        $region34: #{tpu_custom_call.1} parent=11 // pred_check_branch
          %291 = sbr.rel (%p289) target = $region36
        $region35: #{tpu_custom_call.1} parent=11 // pred_region
          _
        $region36: #{tpu_custom_call.1} parent=11 // pred_fallthru
          _
        // Predicated region
        $region37: #{tpu_custom_call.1} parent=11 // pred_check
          %p292 = pneg %p208
        $region38: #{tpu_custom_call.1} parent=11 // pred_check_branch
          %294 = sbr.rel (%p292) target = $region40
        $region39: #{tpu_custom_call.1} parent=11 // pred_region
          _
        $region40: #{tpu_custom_call.1} parent=11 // pred_fallthru
          _
        // Predicated region
        $region41: #{tpu_custom_call.1} parent=11 // pred_check
          %p295 = pneg %p229
        $region42: #{tpu_custom_call.1} parent=11 // pred_check_branch
          %297 = sbr.rel (%p295) target = $region44
        $region43: #{tpu_custom_call.1} parent=11 // pred_region
          _
        $region44: #{tpu_custom_call.1} parent=11 // pred_fallthru
          _
      $region12: #{tpu_custom_call.1} parent=5 // pred_fallthru
        _
      %p298 = scmp.lt.s32.totalorder %s16, 16
      // Predicated region
      $region45: #{tpu_custom_call.1} parent=5 // pred_check
        %p299 = pneg %p298
      $region46: #{tpu_custom_call.1} parent=5 // pred_check_branch
        %301 = sbr.rel (%p299) target = $region48
      $region47: #{tpu_custom_call.1} parent=5 // pred_region
        // Predicated region
        $region49: #{tpu_custom_call.1} parent=47 // pred_check
          %p302 = pneg %p50
        $region50: #{tpu_custom_call.1} parent=47 // pred_check_branch
          %304 = sbr.rel (%p302) target = $region52
        $region51: #{tpu_custom_call.1} parent=47 // pred_region
          %s305 = smul.u32 16, %s24
          %p306 = scmp.lt.s32.totalorder %s23, 0
          %s307 = scalar_select %p306, %s23, 0
          %p308 = scmp.lt.s32.totalorder %s305, 255
          %s309 = scalar_select %p308, %s305, 255
          %s310 = smul.addr %s307, 256
          %s311 = sadd.s32 %s309, %s310
          %s312 = smul.addr %s311, 2
          %s313 = scalar_lea.vmem %s0, %s312
          %s314 = smul.u32 16, %s24
        $region52: #{tpu_custom_call.1} parent=47 // pred_fallthru
          _
      $region48: #{tpu_custom_call.1} parent=5 // pred_fallthru
        _
      %p315 = scmp.le.s32.totalorder 1, %s16
      %p316 = scmp.lt.s32.totalorder %s16, 17
      %p317 = pnand %p315, %p316
      %p318 = pneg %p317
      // Predicated region
      $region53: #{tpu_custom_call.1} parent=5 // pred_check
        _
      $region54: #{tpu_custom_call.1} parent=5 // pred_check_branch
        %320 = sbr.rel (%p317) target = $region56
      $region55: #{tpu_custom_call.1} parent=5 // pred_region
        %s321 = ssub.s32 %s16, 1
        %s322 = smul.u32 16, %s26
        %p323 = scmp.lt.s32.totalorder %s25, 0
        %s324 = scalar_select %p323, %s25, 0
        %p325 = scmp.lt.s32.totalorder %s322, 255
        %s326 = scalar_select %p325, %s322, 255
        %s327 = smul.addr %s324, 256
        %s328 = sadd.s32 %s326, %s327
        %s329 = smul.addr %s328, 2
        %s330 = scalar_lea.vmem %s0, %s329
        %p331 = pneg %p56
        %p332 = pneg %p53
        %p333 = scmp.lt.s32.totalorder %s25, 0
        %s334 = scalar_select %p333, %s25, 0
        %s335 = smul.addr %s334, 2
        %s336 = scalar_lea.vmem %s1, %s335
        %p337 = pneg %p82
        %p338 = pneg %p79
        %p339 = pneg %p103
        %p340 = pneg %p100
        %p341 = pneg %p124
        %p342 = pneg %p121
        %p343 = pneg %p145
        %p344 = pneg %p142
        %p345 = pneg %p166
        %p346 = pneg %p163
        %p347 = pneg %p187
        %p348 = pneg %p184
        %p349 = pneg %p208
        %p350 = pneg %p205
        %p351 = pneg %p229
        %p352 = pneg %p226
        %p353 = pneg %p255
        %p354 = pneg %p252
        %s355 = smul.u32 16, %s26
        %p356 = scmp.lt.s32.totalorder %s25, 0
        %s357 = scalar_select %p356, %s25, 0
        %p358 = scmp.lt.s32.totalorder %s355, 255
        %s359 = scalar_select %p358, %s355, 255
        %s360 = smul.addr %s357, 256
        %s361 = sadd.s32 %s359, %s360
        %s362 = smul.addr %s361, 2
        %s363 = scalar_lea.vmem %s0, %s362
        %s364 = smul.u32 16, %s26
        %p365 = scmp.lt.s32.totalorder %s25, 0
        %s366 = scalar_select %p365, %s25, 0
        %s367 = smul.addr %s366, 2
        %s368 = scalar_lea.vmem %s1, %s367
        %p369 = scmp.eq.s32.totalorder %s26, 0
        // Predicated region
        $region57: #{tpu_custom_call.1} parent=55 // pred_check
          %p370 = pneg %p369
        $region58: #{tpu_custom_call.1} parent=55 // pred_check_branch
          %372 = sbr.rel (%p370) target = $region60
        $region59: #{tpu_custom_call.1} parent=55 // pred_region
          %vm373 = vcmask 254976
          %374 = vst.msk [vmem:[#allocation2] sm:$0x3] %vm373, 0.0
        $region60: #{tpu_custom_call.1} parent=55 // pred_fallthru
          _
        %s375 = smul.u32 %s26, 2048
        %s376 = scalar_lea.vmem %s2, %s375
        %v377 = vld [vmem:[%s376] sm:$0xff]
        %v378 = vld [vmem:[%s376 + $0x8] sm:$0xff]
        %v379 = vld [vmem:[%s376 + $0x10] sm:$0xff]
        %v380 = vld [vmem:[%s376 + $0x18] sm:$0xff]
        %v381 = vld [vmem:[%s376 + $0x20] sm:$0xff]
        %v382 = vld [vmem:[%s376 + $0x28] sm:$0xff]
        %v383 = vld [vmem:[%s376 + $0x30] sm:$0xff]
        %v384 = vld [vmem:[%s376 + $0x38] sm:$0xff]
        %v385 = vld [vmem:[%s376 + $0x40] sm:$0xff]
        %v386 = vld [vmem:[%s376 + $0x48] sm:$0xff]
        %v387 = vld [vmem:[%s376 + $0x50] sm:$0xff]
        %v388 = vld [vmem:[%s376 + $0x58] sm:$0xff]
        %v389 = vld [vmem:[%s376 + $0x60] sm:$0xff]
        %v390 = vld [vmem:[%s376 + $0x68] sm:$0xff]
        %v391 = vld [vmem:[%s376 + $0x70] sm:$0xff]
        %v392 = vld [vmem:[%s376 + $0x78] sm:$0xff]
        %v393 = vld [vmem:[%s376 + $0x80] sm:$0xff]
        %v394 = vld [vmem:[%s376 + $0x88] sm:$0xff]
        %v395 = vld [vmem:[%s376 + $0x90] sm:$0xff]
        %v396 = vld [vmem:[%s376 + $0x98] sm:$0xff]
        %v397 = vld [vmem:[%s376 + $0xa0] sm:$0xff]
        %v398 = vld [vmem:[%s376 + $0xa8] sm:$0xff]
        %v399 = vld [vmem:[%s376 + $0xb0] sm:$0xff]
        %v400 = vld [vmem:[%s376 + $0xb8] sm:$0xff]
        %v401 = vld [vmem:[%s376 + $0xc0] sm:$0xff]
        %v402 = vld [vmem:[%s376 + $0xc8] sm:$0xff]
        %v403 = vld [vmem:[%s376 + $0xd0] sm:$0xff]
        %v404 = vld [vmem:[%s376 + $0xd8] sm:$0xff]
        %v405 = vld [vmem:[%s376 + $0xe0] sm:$0xff]
        %v406 = vld [vmem:[%s376 + $0xe8] sm:$0xff]
        %v407 = vld [vmem:[%s376 + $0xf0] sm:$0xff]
        %v408 = vld [vmem:[%s376 + $0xf8] sm:$0xff]
        %v409 = vld [vmem:[%s376 + $0x100] sm:$0xff]
        %v410 = vld [vmem:[%s376 + $0x108] sm:$0xff]
        %v411 = vld [vmem:[%s376 + $0x110] sm:$0xff]
        %v412 = vld [vmem:[%s376 + $0x118] sm:$0xff]
        %v413 = vld [vmem:[%s376 + $0x120] sm:$0xff]
        %v414 = vld [vmem:[%s376 + $0x128] sm:$0xff]
        %v415 = vld [vmem:[%s376 + $0x130] sm:$0xff]
        %v416 = vld [vmem:[%s376 + $0x138] sm:$0xff]
        %v417 = vld [vmem:[%s376 + $0x140] sm:$0xff]
        %v418 = vld [vmem:[%s376 + $0x148] sm:$0xff]
        %v419 = vld [vmem:[%s376 + $0x150] sm:$0xff]
        %v420 = vld [vmem:[%s376 + $0x158] sm:$0xff]
        %v421 = vld [vmem:[%s376 + $0x160] sm:$0xff]
        %v422 = vld [vmem:[%s376 + $0x168] sm:$0xff]
        %v423 = vld [vmem:[%s376 + $0x170] sm:$0xff]
        %v424 = vld [vmem:[%s376 + $0x178] sm:$0xff]
        %v425 = vld [vmem:[%s376 + $0x180] sm:$0xff]
        %v426 = vld [vmem:[%s376 + $0x188] sm:$0xff]
        %v427 = vld [vmem:[%s376 + $0x190] sm:$0xff]
        %v428 = vld [vmem:[%s376 + $0x198] sm:$0xff]
        %v429 = vld [vmem:[%s376 + $0x1a0] sm:$0xff]
        %v430 = vld [vmem:[%s376 + $0x1a8] sm:$0xff]
        %v431 = vld [vmem:[%s376 + $0x1b0] sm:$0xff]
        %v432 = vld [vmem:[%s376 + $0x1b8] sm:$0xff]
        %v433 = vld [vmem:[%s376 + $0x1c0] sm:$0xff]
        %v434 = vld [vmem:[%s376 + $0x1c8] sm:$0xff]
        %v435 = vld [vmem:[%s376 + $0x1d0] sm:$0xff]
        %v436 = vld [vmem:[%s376 + $0x1d8] sm:$0xff]
        %v437 = vld [vmem:[%s376 + $0x1e0] sm:$0xff]
        %v438 = vld [vmem:[%s376 + $0x1e8] sm:$0xff]
        %v439 = vld [vmem:[%s376 + $0x1f0] sm:$0xff]
        %v440 = vld [vmem:[%s376 + $0x1f8] sm:$0xff]
        %v441 = vld [vmem:[%s376 + $0x200] sm:$0xff]
        %v442 = vld [vmem:[%s376 + $0x208] sm:$0xff]
        %v443 = vld [vmem:[%s376 + $0x210] sm:$0xff]
        %v444 = vld [vmem:[%s376 + $0x218] sm:$0xff]
        %v445 = vld [vmem:[%s376 + $0x220] sm:$0xff]
        %v446 = vld [vmem:[%s376 + $0x228] sm:$0xff]
        %v447 = vld [vmem:[%s376 + $0x230] sm:$0xff]
        %v448 = vld [vmem:[%s376 + $0x238] sm:$0xff]
        %v449 = vld [vmem:[%s376 + $0x240] sm:$0xff]
        %v450 = vld [vmem:[%s376 + $0x248] sm:$0xff]
        %v451 = vld [vmem:[%s376 + $0x250] sm:$0xff]
        %v452 = vld [vmem:[%s376 + $0x258] sm:$0xff]
        %v453 = vld [vmem:[%s376 + $0x260] sm:$0xff]
        %v454 = vld [vmem:[%s376 + $0x268] sm:$0xff]
        %v455 = vld [vmem:[%s376 + $0x270] sm:$0xff]
        %v456 = vld [vmem:[%s376 + $0x278] sm:$0xff]
        %v457 = vld [vmem:[%s376 + $0x280] sm:$0xff]
        %v458 = vld [vmem:[%s376 + $0x288] sm:$0xff]
        %v459 = vld [vmem:[%s376 + $0x290] sm:$0xff]
        %v460 = vld [vmem:[%s376 + $0x298] sm:$0xff]
        %v461 = vld [vmem:[%s376 + $0x2a0] sm:$0xff]
        %v462 = vld [vmem:[%s376 + $0x2a8] sm:$0xff]
        %v463 = vld [vmem:[%s376 + $0x2b0] sm:$0xff]
        %v464 = vld [vmem:[%s376 + $0x2b8] sm:$0xff]
        %v465 = vld [vmem:[%s376 + $0x2c0] sm:$0xff]
        %v466 = vld [vmem:[%s376 + $0x2c8] sm:$0xff]
        %v467 = vld [vmem:[%s376 + $0x2d0] sm:$0xff]
        %v468 = vld [vmem:[%s376 + $0x2d8] sm:$0xff]
        %v469 = vld [vmem:[%s376 + $0x2e0] sm:$0xff]
        %v470 = vld [vmem:[%s376 + $0x2e8] sm:$0xff]
        %v471 = vld [vmem:[%s376 + $0x2f0] sm:$0xff]
        %v472 = vld [vmem:[%s376 + $0x2f8] sm:$0xff]
        %v473 = vld [vmem:[%s376 + $0x300] sm:$0xff]
        %v474 = vld [vmem:[%s376 + $0x308] sm:$0xff]
        %v475 = vld [vmem:[%s376 + $0x310] sm:$0xff]
        %v476 = vld [vmem:[%s376 + $0x318] sm:$0xff]
        %v477 = vld [vmem:[%s376 + $0x320] sm:$0xff]
        %v478 = vld [vmem:[%s376 + $0x328] sm:$0xff]
        %v479 = vld [vmem:[%s376 + $0x330] sm:$0xff]
        %v480 = vld [vmem:[%s376 + $0x338] sm:$0xff]
        %v481 = vld [vmem:[%s376 + $0x340] sm:$0xff]
        %v482 = vld [vmem:[%s376 + $0x348] sm:$0xff]
        %v483 = vld [vmem:[%s376 + $0x350] sm:$0xff]
        %v484 = vld [vmem:[%s376 + $0x358] sm:$0xff]
        %v485 = vld [vmem:[%s376 + $0x360] sm:$0xff]
        %v486 = vld [vmem:[%s376 + $0x368] sm:$0xff]
        %v487 = vld [vmem:[%s376 + $0x370] sm:$0xff]
        %v488 = vld [vmem:[%s376 + $0x378] sm:$0xff]
        %v489 = vld [vmem:[%s376 + $0x380] sm:$0xff]
        %v490 = vld [vmem:[%s376 + $0x388] sm:$0xff]
        %v491 = vld [vmem:[%s376 + $0x390] sm:$0xff]
        %v492 = vld [vmem:[%s376 + $0x398] sm:$0xff]
        %v493 = vld [vmem:[%s376 + $0x3a0] sm:$0xff]
        %v494 = vld [vmem:[%s376 + $0x3a8] sm:$0xff]
        %v495 = vld [vmem:[%s376 + $0x3b0] sm:$0xff]
        %v496 = vld [vmem:[%s376 + $0x3b8] sm:$0xff]
        %v497 = vld [vmem:[%s376 + $0x3c0] sm:$0xff]
        %v498 = vld [vmem:[%s376 + $0x3c8] sm:$0xff]
        %v499 = vld [vmem:[%s376 + $0x3d0] sm:$0xff]
        %v500 = vld [vmem:[%s376 + $0x3d8] sm:$0xff]
        %v501 = vld [vmem:[%s376 + $0x3e0] sm:$0xff]
        %v502 = vld [vmem:[%s376 + $0x3e8] sm:$0xff]
        %v503 = vld [vmem:[%s376 + $0x3f0] sm:$0xff]
        %v504 = vld [vmem:[%s376 + $0x3f8] sm:$0xff]
        %v505 = vld [vmem:[%s376 + $0x400] sm:$0xff]
        %v506 = vld [vmem:[%s376 + $0x408] sm:$0xff]
        %v507 = vld [vmem:[%s376 + $0x410] sm:$0xff]
        %v508 = vld [vmem:[%s376 + $0x418] sm:$0xff]
        %v509 = vld [vmem:[%s376 + $0x420] sm:$0xff]
        %v510 = vld [vmem:[%s376 + $0x428] sm:$0xff]
        %v511 = vld [vmem:[%s376 + $0x430] sm:$0xff]
        %v512 = vld [vmem:[%s376 + $0x438] sm:$0xff]
        %v513 = vld [vmem:[%s376 + $0x440] sm:$0xff]
        %v514 = vld [vmem:[%s376 + $0x448] sm:$0xff]
        %v515 = vld [vmem:[%s376 + $0x450] sm:$0xff]
        %v516 = vld [vmem:[%s376 + $0x458] sm:$0xff]
        %v517 = vld [vmem:[%s376 + $0x460] sm:$0xff]
        %v518 = vld [vmem:[%s376 + $0x468] sm:$0xff]
        %v519 = vld [vmem:[%s376 + $0x470] sm:$0xff]
        %v520 = vld [vmem:[%s376 + $0x478] sm:$0xff]
        %v521 = vld [vmem:[%s376 + $0x480] sm:$0xff]
        %v522 = vld [vmem:[%s376 + $0x488] sm:$0xff]
        %v523 = vld [vmem:[%s376 + $0x490] sm:$0xff]
        %v524 = vld [vmem:[%s376 + $0x498] sm:$0xff]
        %v525 = vld [vmem:[%s376 + $0x4a0] sm:$0xff]
        %v526 = vld [vmem:[%s376 + $0x4a8] sm:$0xff]
        %v527 = vld [vmem:[%s376 + $0x4b0] sm:$0xff]
        %v528 = vld [vmem:[%s376 + $0x4b8] sm:$0xff]
        %v529 = vld [vmem:[%s376 + $0x4c0] sm:$0xff]
        %v530 = vld [vmem:[%s376 + $0x4c8] sm:$0xff]
        %v531 = vld [vmem:[%s376 + $0x4d0] sm:$0xff]
        %v532 = vld [vmem:[%s376 + $0x4d8] sm:$0xff]
        %v533 = vld [vmem:[%s376 + $0x4e0] sm:$0xff]
        %v534 = vld [vmem:[%s376 + $0x4e8] sm:$0xff]
        %v535 = vld [vmem:[%s376 + $0x4f0] sm:$0xff]
        %v536 = vld [vmem:[%s376 + $0x4f8] sm:$0xff]
        %v537 = vld [vmem:[%s376 + $0x500] sm:$0xff]
        %v538 = vld [vmem:[%s376 + $0x508] sm:$0xff]
        %v539 = vld [vmem:[%s376 + $0x510] sm:$0xff]
        %v540 = vld [vmem:[%s376 + $0x518] sm:$0xff]
        %v541 = vld [vmem:[%s376 + $0x520] sm:$0xff]
        %v542 = vld [vmem:[%s376 + $0x528] sm:$0xff]
        %v543 = vld [vmem:[%s376 + $0x530] sm:$0xff]
        %v544 = vld [vmem:[%s376 + $0x538] sm:$0xff]
        %v545 = vld [vmem:[%s376 + $0x540] sm:$0xff]
        %v546 = vld [vmem:[%s376 + $0x548] sm:$0xff]
        %v547 = vld [vmem:[%s376 + $0x550] sm:$0xff]
        %v548 = vld [vmem:[%s376 + $0x558] sm:$0xff]
        %v549 = vld [vmem:[%s376 + $0x560] sm:$0xff]
        %v550 = vld [vmem:[%s376 + $0x568] sm:$0xff]
        %v551 = vld [vmem:[%s376 + $0x570] sm:$0xff]
        %v552 = vld [vmem:[%s376 + $0x578] sm:$0xff]
        %v553 = vld [vmem:[%s376 + $0x580] sm:$0xff]
        %v554 = vld [vmem:[%s376 + $0x588] sm:$0xff]
        %v555 = vld [vmem:[%s376 + $0x590] sm:$0xff]
        %v556 = vld [vmem:[%s376 + $0x598] sm:$0xff]
        %v557 = vld [vmem:[%s376 + $0x5a0] sm:$0xff]
        %v558 = vld [vmem:[%s376 + $0x5a8] sm:$0xff]
        %v559 = vld [vmem:[%s376 + $0x5b0] sm:$0xff]
        %v560 = vld [vmem:[%s376 + $0x5b8] sm:$0xff]
        %v561 = vld [vmem:[%s376 + $0x5c0] sm:$0xff]
        %v562 = vld [vmem:[%s376 + $0x5c8] sm:$0xff]
        %v563 = vld [vmem:[%s376 + $0x5d0] sm:$0xff]
        %v564 = vld [vmem:[%s376 + $0x5d8] sm:$0xff]
        %v565 = vld [vmem:[%s376 + $0x5e0] sm:$0xff]
        %v566 = vld [vmem:[%s376 + $0x5e8] sm:$0xff]
        %v567 = vld [vmem:[%s376 + $0x5f0] sm:$0xff]
        %v568 = vld [vmem:[%s376 + $0x5f8] sm:$0xff]
        %v569 = vld [vmem:[%s376 + $0x600] sm:$0xff]
        %v570 = vld [vmem:[%s376 + $0x608] sm:$0xff]
        %v571 = vld [vmem:[%s376 + $0x610] sm:$0xff]
        %v572 = vld [vmem:[%s376 + $0x618] sm:$0xff]
        %v573 = vld [vmem:[%s376 + $0x620] sm:$0xff]
        %v574 = vld [vmem:[%s376 + $0x628] sm:$0xff]
        %v575 = vld [vmem:[%s376 + $0x630] sm:$0xff]
        %v576 = vld [vmem:[%s376 + $0x638] sm:$0xff]
        %v577 = vld [vmem:[%s376 + $0x640] sm:$0xff]
        %v578 = vld [vmem:[%s376 + $0x648] sm:$0xff]
        %v579 = vld [vmem:[%s376 + $0x650] sm:$0xff]
        %v580 = vld [vmem:[%s376 + $0x658] sm:$0xff]
        %v581 = vld [vmem:[%s376 + $0x660] sm:$0xff]
        %v582 = vld [vmem:[%s376 + $0x668] sm:$0xff]
        %v583 = vld [vmem:[%s376 + $0x670] sm:$0xff]
        %v584 = vld [vmem:[%s376 + $0x678] sm:$0xff]
        %v585 = vld [vmem:[%s376 + $0x680] sm:$0xff]
        %v586 = vld [vmem:[%s376 + $0x688] sm:$0xff]
        %v587 = vld [vmem:[%s376 + $0x690] sm:$0xff]
        %v588 = vld [vmem:[%s376 + $0x698] sm:$0xff]
        %v589 = vld [vmem:[%s376 + $0x6a0] sm:$0xff]
        %v590 = vld [vmem:[%s376 + $0x6a8] sm:$0xff]
        %v591 = vld [vmem:[%s376 + $0x6b0] sm:$0xff]
        %v592 = vld [vmem:[%s376 + $0x6b8] sm:$0xff]
        %v593 = vld [vmem:[%s376 + $0x6c0] sm:$0xff]
        %v594 = vld [vmem:[%s376 + $0x6c8] sm:$0xff]
        %v595 = vld [vmem:[%s376 + $0x6d0] sm:$0xff]
        %v596 = vld [vmem:[%s376 + $0x6d8] sm:$0xff]
        %v597 = vld [vmem:[%s376 + $0x6e0] sm:$0xff]
        %v598 = vld [vmem:[%s376 + $0x6e8] sm:$0xff]
        %v599 = vld [vmem:[%s376 + $0x6f0] sm:$0xff]
        %v600 = vld [vmem:[%s376 + $0x6f8] sm:$0xff]
        %v601 = vld [vmem:[%s376 + $0x700] sm:$0xff]
        %v602 = vld [vmem:[%s376 + $0x708] sm:$0xff]
        %v603 = vld [vmem:[%s376 + $0x710] sm:$0xff]
        %v604 = vld [vmem:[%s376 + $0x718] sm:$0xff]
        %v605 = vld [vmem:[%s376 + $0x720] sm:$0xff]
        %v606 = vld [vmem:[%s376 + $0x728] sm:$0xff]
        %v607 = vld [vmem:[%s376 + $0x730] sm:$0xff]
        %v608 = vld [vmem:[%s376 + $0x738] sm:$0xff]
        %v609 = vld [vmem:[%s376 + $0x740] sm:$0xff]
        %v610 = vld [vmem:[%s376 + $0x748] sm:$0xff]
        %v611 = vld [vmem:[%s376 + $0x750] sm:$0xff]
        %v612 = vld [vmem:[%s376 + $0x758] sm:$0xff]
        %v613 = vld [vmem:[%s376 + $0x760] sm:$0xff]
        %v614 = vld [vmem:[%s376 + $0x768] sm:$0xff]
        %v615 = vld [vmem:[%s376 + $0x770] sm:$0xff]
        %v616 = vld [vmem:[%s376 + $0x778] sm:$0xff]
        %v617 = vld [vmem:[%s376 + $0x780] sm:$0xff]
        %v618 = vld [vmem:[%s376 + $0x788] sm:$0xff]
        %v619 = vld [vmem:[%s376 + $0x790] sm:$0xff]
        %v620 = vld [vmem:[%s376 + $0x798] sm:$0xff]
        %v621 = vld [vmem:[%s376 + $0x7a0] sm:$0xff]
        %v622 = vld [vmem:[%s376 + $0x7a8] sm:$0xff]
        %v623 = vld [vmem:[%s376 + $0x7b0] sm:$0xff]
        %v624 = vld [vmem:[%s376 + $0x7b8] sm:$0xff]
        %v625 = vld [vmem:[%s376 + $0x7c0] sm:$0xff]
        %v626 = vld [vmem:[%s376 + $0x7c8] sm:$0xff]
        %v627 = vld [vmem:[%s376 + $0x7d0] sm:$0xff]
        %v628 = vld [vmem:[%s376 + $0x7d8] sm:$0xff]
        %v629 = vld [vmem:[%s376 + $0x7e0] sm:$0xff]
        %v630 = vld [vmem:[%s376 + $0x7e8] sm:$0xff]
        %v631 = vld [vmem:[%s376 + $0x7f0] sm:$0xff]
        %v632 = vld [vmem:[%s376 + $0x7f8] sm:$0xff]
        %v633 = vld [vmem:[#allocation2] sm:$0x3]
        %v634 = vld [vmem:[%s363] sm:$0xff]
        %v635 = vld [vmem:[%s363 + $0x8] sm:$0xff]
        %v636 = vld [vmem:[%s363 + $0x10] sm:$0xff]
        %v637 = vld [vmem:[%s363 + $0x18] sm:$0xff]
        %v642 = vcombine.high %v634, %v634
        %v644 = vunpack.c.l.s4 1983009808
        %v645 = vunpack.c.0.s8 %v644
        %v646 = vlaneseq
        %v647 = vshrl.u32 %v646, 7
        %v648 = vsub.s32 %v645, %v647
        %v649 = vrot.slane %v634, %v648
        %v651 = vunpack.c.l.s4 1983009808
        %v652 = vunpack.c.0.s8 %v651
        %v653 = vlaneseq
        %v654 = vshrl.u32 %v653, 7
        %v655 = vsub.s32 %v652, %v654
        %v656 = vrot.slane %v642, %v655
        %v657 = vcombine.high %v649, %v649
        %v658 = vcombine.high %v656, %v656
        %v659 = vcombine.high %v635, %v635
        %v661 = vunpack.c.l.s4 1983009808
        %v662 = vunpack.c.0.s8 %v661
        %v663 = vlaneseq
        %v664 = vshrl.u32 %v663, 7
        %v665 = vsub.s32 %v662, %v664
        %v666 = vrot.slane %v635, %v665
        %v668 = vunpack.c.l.s4 1983009808
        %v669 = vunpack.c.0.s8 %v668
        %v670 = vlaneseq
        %v671 = vshrl.u32 %v670, 7
        %v672 = vsub.s32 %v669, %v671
        %v673 = vrot.slane %v659, %v672
        %v674 = vcombine.high %v666, %v666
        %v675 = vcombine.high %v673, %v673
        %v676 = vcombine.high %v636, %v636
        %v678 = vunpack.c.l.s4 1983009808
        %v679 = vunpack.c.0.s8 %v678
        %v680 = vlaneseq
        %v681 = vshrl.u32 %v680, 7
        %v682 = vsub.s32 %v679, %v681
        %v683 = vrot.slane %v636, %v682
        %v685 = vunpack.c.l.s4 1983009808
        %v686 = vunpack.c.0.s8 %v685
        %v687 = vlaneseq
        %v688 = vshrl.u32 %v687, 7
        %v689 = vsub.s32 %v686, %v688
        %v690 = vrot.slane %v676, %v689
        %v691 = vcombine.high %v683, %v683
        %v692 = vcombine.high %v690, %v690
        %v693 = vcombine.high %v637, %v637
        %v695 = vunpack.c.l.s4 1983009808
        %v696 = vunpack.c.0.s8 %v695
        %v697 = vlaneseq
        %v698 = vshrl.u32 %v697, 7
        %v699 = vsub.s32 %v696, %v698
        %v700 = vrot.slane %v637, %v699
        %v702 = vunpack.c.l.s4 1983009808
        %v703 = vunpack.c.0.s8 %v702
        %v704 = vlaneseq
        %v705 = vshrl.u32 %v704, 7
        %v706 = vsub.s32 %v703, %v705
        %v707 = vrot.slane %v693, %v706
        %v708 = vcombine.high %v700, %v700
        %v709 = vcombine.high %v707, %v707
        %726 = vmatprep.subr.mxu0 0.0
        %727 = vmatpush1.msra.mxu0 %v377
        %728 = vmatprep.subr.mxu0 0.0
        %729 = vmatpush1.msra.mxu0 %v378
        %730 = vmatprep.subr.mxu0 0.0
        %731 = vmatpush1.msra.mxu0 %v379
        %732 = vmatprep.subr.mxu0 0.0
        %733 = vmatpush1.msra.mxu0 %v380
        %734 = vmatprep.subr.mxu0 0.0
        %735 = vmatpush1.msra.mxu0 %v381
        %736 = vmatprep.subr.mxu0 0.0
        %737 = vmatpush1.msra.mxu0 %v382
        %738 = vmatprep.subr.mxu0 0.0
        %739 = vmatpush1.msra.mxu0 %v383
        %740 = vmatprep.subr.mxu0 0.0
        %741 = vmatpush1.msra.mxu0 %v384
        %742 = vmatprep.subr.mxu0 0.0
        %743 = vmatpush1.msra.mxu0 %v385
        %744 = vmatprep.subr.mxu0 0.0
        %745 = vmatpush1.msra.mxu0 %v386
        %746 = vmatprep.subr.mxu0 0.0
        %747 = vmatpush1.msra.mxu0 %v387
        %748 = vmatprep.subr.mxu0 0.0
        %749 = vmatpush1.msra.mxu0 %v388
        %750 = vmatprep.subr.mxu0 0.0
        %751 = vmatpush1.msra.mxu0 %v389
        %752 = vmatprep.subr.mxu0 0.0
        %753 = vmatpush1.msra.mxu0 %v390
        %754 = vmatprep.subr.mxu0 0.0
        %755 = vmatpush1.msra.mxu0 %v391
        %756 = vmatprep.subr.mxu0 0.0
        %757 = vmatpush1.msra.mxu0 %v392
        %758 = vmatprep.subr.mxu0 0.0
        %759 = vmatpush1.msra.mxu0 %v393
        %760 = vmatprep.subr.mxu0 0.0
        %761 = vmatpush1.msra.mxu0 %v394
        %762 = vmatprep.subr.mxu0 0.0
        %763 = vmatpush1.msra.mxu0 %v395
        %764 = vmatprep.subr.mxu0 0.0
        %765 = vmatpush1.msra.mxu0 %v396
        %766 = vmatprep.subr.mxu0 0.0
        %767 = vmatpush1.msra.mxu0 %v397
        %768 = vmatprep.subr.mxu0 0.0
        %769 = vmatpush1.msra.mxu0 %v398
        %770 = vmatprep.subr.mxu0 0.0
        %771 = vmatpush1.msra.mxu0 %v399
        %772 = vmatprep.subr.mxu0 0.0
        %773 = vmatpush1.msra.mxu0 %v400
        %774 = vmatprep.subr.mxu0 0.0
        %775 = vmatpush1.msra.mxu0 %v401
        %776 = vmatprep.subr.mxu0 0.0
        %777 = vmatpush1.msra.mxu0 %v402
        %778 = vmatprep.subr.mxu0 0.0
        %779 = vmatpush1.msra.mxu0 %v403
        %780 = vmatprep.subr.mxu0 0.0
        %781 = vmatpush1.msra.mxu0 %v404
        %782 = vmatprep.subr.mxu0 0.0
        %783 = vmatpush1.msra.mxu0 %v405
        %784 = vmatprep.subr.mxu0 0.0
        %785 = vmatpush1.msra.mxu0 %v406
        %786 = vmatprep.subr.mxu0 0.0
        %787 = vmatpush1.msra.mxu0 %v407
        %788 = vmatprep.subr.mxu0 0.0
        %789 = vmatpush1.msra.mxu0 %v408
        %790 = vmatprep.mubr.f32.mxu0 %v657
        %791 = vmatmul.mubr.f32.gmra.mrb[0].mxu0 %v649
        %v792 = vpop.f32.mrb[0].mxu0
        %v793 = vadd.f32 0.0, %v792
        %v794 = vpop.f32.mrb[0].mxu0
        %795 = vdwg.mxu0
        %796 = vmatprep.subr.mxu0 0.0
        %797 = vmatpush1.msra.mxu0 %v409
        %798 = vmatprep.subr.mxu0 0.0
        %799 = vmatpush1.msra.mxu0 %v410
        %800 = vmatprep.subr.mxu0 0.0
        %801 = vmatpush1.msra.mxu0 %v411
        %802 = vmatprep.subr.mxu0 0.0
        %803 = vmatpush1.msra.mxu0 %v412
        %804 = vmatprep.subr.mxu0 0.0
        %805 = vmatpush1.msra.mxu0 %v413
        %806 = vmatprep.subr.mxu0 0.0
        %807 = vmatpush1.msra.mxu0 %v414
        %808 = vmatprep.subr.mxu0 0.0
        %809 = vmatpush1.msra.mxu0 %v415
        %810 = vmatprep.subr.mxu0 0.0
        %811 = vmatpush1.msra.mxu0 %v416
        %812 = vmatprep.subr.mxu0 0.0
        %813 = vmatpush1.msra.mxu0 %v417
        %814 = vmatprep.subr.mxu0 0.0
        %815 = vmatpush1.msra.mxu0 %v418
        %816 = vmatprep.subr.mxu0 0.0
        %817 = vmatpush1.msra.mxu0 %v419
        %818 = vmatprep.subr.mxu0 0.0
        %819 = vmatpush1.msra.mxu0 %v420
        %820 = vmatprep.subr.mxu0 0.0
        %821 = vmatpush1.msra.mxu0 %v421
        %822 = vmatprep.subr.mxu0 0.0
        %823 = vmatpush1.msra.mxu0 %v422
        %824 = vmatprep.subr.mxu0 0.0
        %825 = vmatpush1.msra.mxu0 %v423
        %826 = vmatprep.subr.mxu0 0.0
        %827 = vmatpush1.msra.mxu0 %v424
        %828 = vmatprep.subr.mxu0 0.0
        %829 = vmatpush1.msra.mxu0 %v425
        %830 = vmatprep.subr.mxu0 0.0
        %831 = vmatpush1.msra.mxu0 %v426
        %832 = vmatprep.subr.mxu0 0.0
        %833 = vmatpush1.msra.mxu0 %v427
        %834 = vmatprep.subr.mxu0 0.0
        %835 = vmatpush1.msra.mxu0 %v428
        %836 = vmatprep.subr.mxu0 0.0
        %837 = vmatpush1.msra.mxu0 %v429
        %838 = vmatprep.subr.mxu0 0.0
        %839 = vmatpush1.msra.mxu0 %v430
        %840 = vmatprep.subr.mxu0 0.0
        %841 = vmatpush1.msra.mxu0 %v431
        %842 = vmatprep.subr.mxu0 0.0
        %843 = vmatpush1.msra.mxu0 %v432
        %844 = vmatprep.subr.mxu0 0.0
        %845 = vmatpush1.msra.mxu0 %v433
        %846 = vmatprep.subr.mxu0 0.0
        %847 = vmatpush1.msra.mxu0 %v434
        %848 = vmatprep.subr.mxu0 0.0
        %849 = vmatpush1.msra.mxu0 %v435
        %850 = vmatprep.subr.mxu0 0.0
        %851 = vmatpush1.msra.mxu0 %v436
        %852 = vmatprep.subr.mxu0 0.0
        %853 = vmatpush1.msra.mxu0 %v437
        %854 = vmatprep.subr.mxu0 0.0
        %855 = vmatpush1.msra.mxu0 %v438
        %856 = vmatprep.subr.mxu0 0.0
        %857 = vmatpush1.msra.mxu0 %v439
        %858 = vmatprep.subr.mxu0 0.0
        %859 = vmatpush1.msra.mxu0 %v440
        %860 = vmatprep.mubr.f32.mxu0 %v658
        %861 = vmatmul.mubr.f32.gmra.mrb[0].mxu0 %v656
        %v862 = vpop.f32.mrb[0].mxu0
        %v863 = vadd.f32 %v793, %v862
        %v864 = vpop.f32.mrb[0].mxu0
        %865 = vdwg.mxu0
        %866 = vmatprep.subr.mxu0 0.0
        %867 = vmatpush1.msra.mxu0 %v441
        %868 = vmatprep.subr.mxu0 0.0
        %869 = vmatpush1.msra.mxu0 %v442
        %870 = vmatprep.subr.mxu0 0.0
        %871 = vmatpush1.msra.mxu0 %v443
        %872 = vmatprep.subr.mxu0 0.0
        %873 = vmatpush1.msra.mxu0 %v444
        %874 = vmatprep.subr.mxu0 0.0
        %875 = vmatpush1.msra.mxu0 %v445
        %876 = vmatprep.subr.mxu0 0.0
        %877 = vmatpush1.msra.mxu0 %v446
        %878 = vmatprep.subr.mxu0 0.0
        %879 = vmatpush1.msra.mxu0 %v447
        %880 = vmatprep.subr.mxu0 0.0
        %881 = vmatpush1.msra.mxu0 %v448
        %882 = vmatprep.subr.mxu0 0.0
        %883 = vmatpush1.msra.mxu0 %v449
        %884 = vmatprep.subr.mxu0 0.0
        %885 = vmatpush1.msra.mxu0 %v450
        %886 = vmatprep.subr.mxu0 0.0
        %887 = vmatpush1.msra.mxu0 %v451
        %888 = vmatprep.subr.mxu0 0.0
        %889 = vmatpush1.msra.mxu0 %v452
        %890 = vmatprep.subr.mxu0 0.0
        %891 = vmatpush1.msra.mxu0 %v453
        %892 = vmatprep.subr.mxu0 0.0
        %893 = vmatpush1.msra.mxu0 %v454
        %894 = vmatprep.subr.mxu0 0.0
        %895 = vmatpush1.msra.mxu0 %v455
        %896 = vmatprep.subr.mxu0 0.0
        %897 = vmatpush1.msra.mxu0 %v456
        %898 = vmatprep.subr.mxu0 0.0
        %899 = vmatpush1.msra.mxu0 %v457
        %900 = vmatprep.subr.mxu0 0.0
        %901 = vmatpush1.msra.mxu0 %v458
        %902 = vmatprep.subr.mxu0 0.0
        %903 = vmatpush1.msra.mxu0 %v459
        %904 = vmatprep.subr.mxu0 0.0
        %905 = vmatpush1.msra.mxu0 %v460
        %906 = vmatprep.subr.mxu0 0.0
        %907 = vmatpush1.msra.mxu0 %v461
        %908 = vmatprep.subr.mxu0 0.0
        %909 = vmatpush1.msra.mxu0 %v462
        %910 = vmatprep.subr.mxu0 0.0
        %911 = vmatpush1.msra.mxu0 %v463
        %912 = vmatprep.subr.mxu0 0.0
        %913 = vmatpush1.msra.mxu0 %v464
        %914 = vmatprep.subr.mxu0 0.0
        %915 = vmatpush1.msra.mxu0 %v465
        %916 = vmatprep.subr.mxu0 0.0
        %917 = vmatpush1.msra.mxu0 %v466
        %918 = vmatprep.subr.mxu0 0.0
        %919 = vmatpush1.msra.mxu0 %v467
        %920 = vmatprep.subr.mxu0 0.0
        %921 = vmatpush1.msra.mxu0 %v468
        %922 = vmatprep.subr.mxu0 0.0
        %923 = vmatpush1.msra.mxu0 %v469
        %924 = vmatprep.subr.mxu0 0.0
        %925 = vmatpush1.msra.mxu0 %v470
        %926 = vmatprep.subr.mxu0 0.0
        %927 = vmatpush1.msra.mxu0 %v471
        %928 = vmatprep.subr.mxu0 0.0
        %929 = vmatpush1.msra.mxu0 %v472
        %930 = vmatprep.mubr.f32.mxu0 %v674
        %931 = vmatmul.mubr.f32.gmra.mrb[0].mxu0 %v666
        %v932 = vpop.f32.mrb[0].mxu0
        %v933 = vadd.f32 %v863, %v932
        %v934 = vpop.f32.mrb[0].mxu0
        %935 = vdwg.mxu0
        %936 = vmatprep.subr.mxu0 0.0
        %937 = vmatpush1.msra.mxu0 %v473
        %938 = vmatprep.subr.mxu0 0.0
        %939 = vmatpush1.msra.mxu0 %v474
        %940 = vmatprep.subr.mxu0 0.0
        %941 = vmatpush1.msra.mxu0 %v475
        %942 = vmatprep.subr.mxu0 0.0
        %943 = vmatpush1.msra.mxu0 %v476
        %944 = vmatprep.subr.mxu0 0.0
        %945 = vmatpush1.msra.mxu0 %v477
        %946 = vmatprep.subr.mxu0 0.0
        %947 = vmatpush1.msra.mxu0 %v478
        %948 = vmatprep.subr.mxu0 0.0
        %949 = vmatpush1.msra.mxu0 %v479
        %950 = vmatprep.subr.mxu0 0.0
        %951 = vmatpush1.msra.mxu0 %v480
        %952 = vmatprep.subr.mxu0 0.0
        %953 = vmatpush1.msra.mxu0 %v481
        %954 = vmatprep.subr.mxu0 0.0
        %955 = vmatpush1.msra.mxu0 %v482
        %956 = vmatprep.subr.mxu0 0.0
        %957 = vmatpush1.msra.mxu0 %v483
        %958 = vmatprep.subr.mxu0 0.0
        %959 = vmatpush1.msra.mxu0 %v484
        %960 = vmatprep.subr.mxu0 0.0
        %961 = vmatpush1.msra.mxu0 %v485
        %962 = vmatprep.subr.mxu0 0.0
        %963 = vmatpush1.msra.mxu0 %v486
        %964 = vmatprep.subr.mxu0 0.0
        %965 = vmatpush1.msra.mxu0 %v487
        %966 = vmatprep.subr.mxu0 0.0
        %967 = vmatpush1.msra.mxu0 %v488
        %968 = vmatprep.subr.mxu0 0.0
        %969 = vmatpush1.msra.mxu0 %v489
        %970 = vmatprep.subr.mxu0 0.0
        %971 = vmatpush1.msra.mxu0 %v490
        %972 = vmatprep.subr.mxu0 0.0
        %973 = vmatpush1.msra.mxu0 %v491
        %974 = vmatprep.subr.mxu0 0.0
        %975 = vmatpush1.msra.mxu0 %v492
        %976 = vmatprep.subr.mxu0 0.0
        %977 = vmatpush1.msra.mxu0 %v493
        %978 = vmatprep.subr.mxu0 0.0
        %979 = vmatpush1.msra.mxu0 %v494
        %980 = vmatprep.subr.mxu0 0.0
        %981 = vmatpush1.msra.mxu0 %v495
        %982 = vmatprep.subr.mxu0 0.0
        %983 = vmatpush1.msra.mxu0 %v496
        %984 = vmatprep.subr.mxu0 0.0
        %985 = vmatpush1.msra.mxu0 %v497
        %986 = vmatprep.subr.mxu0 0.0
        %987 = vmatpush1.msra.mxu0 %v498
        %988 = vmatprep.subr.mxu0 0.0
        %989 = vmatpush1.msra.mxu0 %v499
        %990 = vmatprep.subr.mxu0 0.0
        %991 = vmatpush1.msra.mxu0 %v500
        %992 = vmatprep.subr.mxu0 0.0
        %993 = vmatpush1.msra.mxu0 %v501
        %994 = vmatprep.subr.mxu0 0.0
        %995 = vmatpush1.msra.mxu0 %v502
        %996 = vmatprep.subr.mxu0 0.0
        %997 = vmatpush1.msra.mxu0 %v503
        %998 = vmatprep.subr.mxu0 0.0
        %999 = vmatpush1.msra.mxu0 %v504
        %1000 = vmatprep.mubr.f32.mxu0 %v675
        %1001 = vmatmul.mubr.f32.gmra.mrb[0].mxu0 %v673
        %v1002 = vpop.f32.mrb[0].mxu0
        %v1003 = vadd.f32 %v933, %v1002
        %v1004 = vpop.f32.mrb[0].mxu0
        %1005 = vdwg.mxu0
        %1006 = vmatprep.subr.mxu0 0.0
        %1007 = vmatpush1.msra.mxu0 %v505
        %1008 = vmatprep.subr.mxu0 0.0
        %1009 = vmatpush1.msra.mxu0 %v506
        %1010 = vmatprep.subr.mxu0 0.0
        %1011 = vmatpush1.msra.mxu0 %v507
        %1012 = vmatprep.subr.mxu0 0.0
        %1013 = vmatpush1.msra.mxu0 %v508
        %1014 = vmatprep.subr.mxu0 0.0
        %1015 = vmatpush1.msra.mxu0 %v509
        %1016 = vmatprep.subr.mxu0 0.0
        %1017 = vmatpush1.msra.mxu0 %v510
        %1018 = vmatprep.subr.mxu0 0.0
        %1019 = vmatpush1.msra.mxu0 %v511
        %1020 = vmatprep.subr.mxu0 0.0
        %1021 = vmatpush1.msra.mxu0 %v512
        %1022 = vmatprep.subr.mxu0 0.0
        %1023 = vmatpush1.msra.mxu0 %v513
        %1024 = vmatprep.subr.mxu0 0.0
        %1025 = vmatpush1.msra.mxu0 %v514
        %1026 = vmatprep.subr.mxu0 0.0
        %1027 = vmatpush1.msra.mxu0 %v515
        %1028 = vmatprep.subr.mxu0 0.0
        %1029 = vmatpush1.msra.mxu0 %v516
        %1030 = vmatprep.subr.mxu0 0.0
        %1031 = vmatpush1.msra.mxu0 %v517
        %1032 = vmatprep.subr.mxu0 0.0
        %1033 = vmatpush1.msra.mxu0 %v518
        %1034 = vmatprep.subr.mxu0 0.0
        %1035 = vmatpush1.msra.mxu0 %v519
        %1036 = vmatprep.subr.mxu0 0.0
        %1037 = vmatpush1.msra.mxu0 %v520
        %1038 = vmatprep.subr.mxu0 0.0
        %1039 = vmatpush1.msra.mxu0 %v521
        %1040 = vmatprep.subr.mxu0 0.0
        %1041 = vmatpush1.msra.mxu0 %v522
        %1042 = vmatprep.subr.mxu0 0.0
        %1043 = vmatpush1.msra.mxu0 %v523
        %1044 = vmatprep.subr.mxu0 0.0
        %1045 = vmatpush1.msra.mxu0 %v524
        %1046 = vmatprep.subr.mxu0 0.0
        %1047 = vmatpush1.msra.mxu0 %v525
        %1048 = vmatprep.subr.mxu0 0.0
        %1049 = vmatpush1.msra.mxu0 %v526
        %1050 = vmatprep.subr.mxu0 0.0
        %1051 = vmatpush1.msra.mxu0 %v527
        %1052 = vmatprep.subr.mxu0 0.0
        %1053 = vmatpush1.msra.mxu0 %v528
        %1054 = vmatprep.subr.mxu0 0.0
        %1055 = vmatpush1.msra.mxu0 %v529
        %1056 = vmatprep.subr.mxu0 0.0
        %1057 = vmatpush1.msra.mxu0 %v530
        %1058 = vmatprep.subr.mxu0 0.0
        %1059 = vmatpush1.msra.mxu0 %v531
        %1060 = vmatprep.subr.mxu0 0.0
        %1061 = vmatpush1.msra.mxu0 %v532
        %1062 = vmatprep.subr.mxu0 0.0
        %1063 = vmatpush1.msra.mxu0 %v533
        %1064 = vmatprep.subr.mxu0 0.0
        %1065 = vmatpush1.msra.mxu0 %v534
        %1066 = vmatprep.subr.mxu0 0.0
        %1067 = vmatpush1.msra.mxu0 %v535
        %1068 = vmatprep.subr.mxu0 0.0
        %1069 = vmatpush1.msra.mxu0 %v536
        %1070 = vmatprep.mubr.f32.mxu0 %v691
        %1071 = vmatmul.mubr.f32.gmra.mrb[0].mxu0 %v683
        %v1072 = vpop.f32.mrb[0].mxu0
        %v1073 = vadd.f32 %v1003, %v1072
        %v1074 = vpop.f32.mrb[0].mxu0
        %1075 = vdwg.mxu0
        %1076 = vmatprep.subr.mxu0 0.0
        %1077 = vmatpush1.msra.mxu0 %v537
        %1078 = vmatprep.subr.mxu0 0.0
        %1079 = vmatpush1.msra.mxu0 %v538
        %1080 = vmatprep.subr.mxu0 0.0
        %1081 = vmatpush1.msra.mxu0 %v539
        %1082 = vmatprep.subr.mxu0 0.0
        %1083 = vmatpush1.msra.mxu0 %v540
        %1084 = vmatprep.subr.mxu0 0.0
        %1085 = vmatpush1.msra.mxu0 %v541
        %1086 = vmatprep.subr.mxu0 0.0
        %1087 = vmatpush1.msra.mxu0 %v542
        %1088 = vmatprep.subr.mxu0 0.0
        %1089 = vmatpush1.msra.mxu0 %v543
        %1090 = vmatprep.subr.mxu0 0.0
        %1091 = vmatpush1.msra.mxu0 %v544
        %1092 = vmatprep.subr.mxu0 0.0
        %1093 = vmatpush1.msra.mxu0 %v545
        %1094 = vmatprep.subr.mxu0 0.0
        %1095 = vmatpush1.msra.mxu0 %v546
        %1096 = vmatprep.subr.mxu0 0.0
        %1097 = vmatpush1.msra.mxu0 %v547
        %1098 = vmatprep.subr.mxu0 0.0
        %1099 = vmatpush1.msra.mxu0 %v548
        %1100 = vmatprep.subr.mxu0 0.0
        %1101 = vmatpush1.msra.mxu0 %v549
        %1102 = vmatprep.subr.mxu0 0.0
        %1103 = vmatpush1.msra.mxu0 %v550
        %1104 = vmatprep.subr.mxu0 0.0
        %1105 = vmatpush1.msra.mxu0 %v551
        %1106 = vmatprep.subr.mxu0 0.0
        %1107 = vmatpush1.msra.mxu0 %v552
        %1108 = vmatprep.subr.mxu0 0.0
        %1109 = vmatpush1.msra.mxu0 %v553
        %1110 = vmatprep.subr.mxu0 0.0
        %1111 = vmatpush1.msra.mxu0 %v554
        %1112 = vmatprep.subr.mxu0 0.0
        %1113 = vmatpush1.msra.mxu0 %v555
        %1114 = vmatprep.subr.mxu0 0.0
        %1115 = vmatpush1.msra.mxu0 %v556
        %1116 = vmatprep.subr.mxu0 0.0
        %1117 = vmatpush1.msra.mxu0 %v557
        %1118 = vmatprep.subr.mxu0 0.0
        %1119 = vmatpush1.msra.mxu0 %v558
        %1120 = vmatprep.subr.mxu0 0.0
        %1121 = vmatpush1.msra.mxu0 %v559
        %1122 = vmatprep.subr.mxu0 0.0
        %1123 = vmatpush1.msra.mxu0 %v560
        %1124 = vmatprep.subr.mxu0 0.0
        %1125 = vmatpush1.msra.mxu0 %v561
        %1126 = vmatprep.subr.mxu0 0.0
        %1127 = vmatpush1.msra.mxu0 %v562
        %1128 = vmatprep.subr.mxu0 0.0
        %1129 = vmatpush1.msra.mxu0 %v563
        %1130 = vmatprep.subr.mxu0 0.0
        %1131 = vmatpush1.msra.mxu0 %v564
        %1132 = vmatprep.subr.mxu0 0.0
        %1133 = vmatpush1.msra.mxu0 %v565
        %1134 = vmatprep.subr.mxu0 0.0
        %1135 = vmatpush1.msra.mxu0 %v566
        %1136 = vmatprep.subr.mxu0 0.0
        %1137 = vmatpush1.msra.mxu0 %v567
        %1138 = vmatprep.subr.mxu0 0.0
        %1139 = vmatpush1.msra.mxu0 %v568
        %1140 = vmatprep.mubr.f32.mxu0 %v692
        %1141 = vmatmul.mubr.f32.gmra.mrb[0].mxu0 %v690
        %v1142 = vpop.f32.mrb[0].mxu0
        %v1143 = vadd.f32 %v1073, %v1142
        %v1144 = vpop.f32.mrb[0].mxu0
        %1145 = vdwg.mxu0
        %1146 = vmatprep.subr.mxu0 0.0
        %1147 = vmatpush1.msra.mxu0 %v569
        %1148 = vmatprep.subr.mxu0 0.0
        %1149 = vmatpush1.msra.mxu0 %v570
        %1150 = vmatprep.subr.mxu0 0.0
        %1151 = vmatpush1.msra.mxu0 %v571
        %1152 = vmatprep.subr.mxu0 0.0
        %1153 = vmatpush1.msra.mxu0 %v572
        %1154 = vmatprep.subr.mxu0 0.0
        %1155 = vmatpush1.msra.mxu0 %v573
        %1156 = vmatprep.subr.mxu0 0.0
        %1157 = vmatpush1.msra.mxu0 %v574
        %1158 = vmatprep.subr.mxu0 0.0
        %1159 = vmatpush1.msra.mxu0 %v575
        %1160 = vmatprep.subr.mxu0 0.0
        %1161 = vmatpush1.msra.mxu0 %v576
        %1162 = vmatprep.subr.mxu0 0.0
        %1163 = vmatpush1.msra.mxu0 %v577
        %1164 = vmatprep.subr.mxu0 0.0
        %1165 = vmatpush1.msra.mxu0 %v578
        %1166 = vmatprep.subr.mxu0 0.0
        %1167 = vmatpush1.msra.mxu0 %v579
        %1168 = vmatprep.subr.mxu0 0.0
        %1169 = vmatpush1.msra.mxu0 %v580
        %1170 = vmatprep.subr.mxu0 0.0
        %1171 = vmatpush1.msra.mxu0 %v581
        %1172 = vmatprep.subr.mxu0 0.0
        %1173 = vmatpush1.msra.mxu0 %v582
        %1174 = vmatprep.subr.mxu0 0.0
        %1175 = vmatpush1.msra.mxu0 %v583
        %1176 = vmatprep.subr.mxu0 0.0
        %1177 = vmatpush1.msra.mxu0 %v584
        %1178 = vmatprep.subr.mxu0 0.0
        %1179 = vmatpush1.msra.mxu0 %v585
        %1180 = vmatprep.subr.mxu0 0.0
        %1181 = vmatpush1.msra.mxu0 %v586
        %1182 = vmatprep.subr.mxu0 0.0
        %1183 = vmatpush1.msra.mxu0 %v587
        %1184 = vmatprep.subr.mxu0 0.0
        %1185 = vmatpush1.msra.mxu0 %v588
        %1186 = vmatprep.subr.mxu0 0.0
        %1187 = vmatpush1.msra.mxu0 %v589
        %1188 = vmatprep.subr.mxu0 0.0
        %1189 = vmatpush1.msra.mxu0 %v590
        %1190 = vmatprep.subr.mxu0 0.0
        %1191 = vmatpush1.msra.mxu0 %v591
        %1192 = vmatprep.subr.mxu0 0.0
        %1193 = vmatpush1.msra.mxu0 %v592
        %1194 = vmatprep.subr.mxu0 0.0
        %1195 = vmatpush1.msra.mxu0 %v593
        %1196 = vmatprep.subr.mxu0 0.0
        %1197 = vmatpush1.msra.mxu0 %v594
        %1198 = vmatprep.subr.mxu0 0.0
        %1199 = vmatpush1.msra.mxu0 %v595
        %1200 = vmatprep.subr.mxu0 0.0
        %1201 = vmatpush1.msra.mxu0 %v596
        %1202 = vmatprep.subr.mxu0 0.0
        %1203 = vmatpush1.msra.mxu0 %v597
        %1204 = vmatprep.subr.mxu0 0.0
        %1205 = vmatpush1.msra.mxu0 %v598
        %1206 = vmatprep.subr.mxu0 0.0
        %1207 = vmatpush1.msra.mxu0 %v599
        %1208 = vmatprep.subr.mxu0 0.0
        %1209 = vmatpush1.msra.mxu0 %v600
        %1210 = vmatprep.mubr.f32.mxu0 %v708
        %1211 = vmatmul.mubr.f32.gmra.mrb[0].mxu0 %v700
        %v1212 = vpop.f32.mrb[0].mxu0
        %v1213 = vadd.f32 %v1143, %v1212
        %v1214 = vpop.f32.mrb[0].mxu0
        %1215 = vdwg.mxu0
        %1216 = vmatprep.subr.mxu0 0.0
        %1217 = vmatpush1.msra.mxu0 %v601
        %1218 = vmatprep.subr.mxu0 0.0
        %1219 = vmatpush1.msra.mxu0 %v602
        %1220 = vmatprep.subr.mxu0 0.0
        %1221 = vmatpush1.msra.mxu0 %v603
        %1222 = vmatprep.subr.mxu0 0.0
        %1223 = vmatpush1.msra.mxu0 %v604
        %1224 = vmatprep.subr.mxu0 0.0
        %1225 = vmatpush1.msra.mxu0 %v605
        %1226 = vmatprep.subr.mxu0 0.0
        %1227 = vmatpush1.msra.mxu0 %v606
        %1228 = vmatprep.subr.mxu0 0.0
        %1229 = vmatpush1.msra.mxu0 %v607
        %1230 = vmatprep.subr.mxu0 0.0
        %1231 = vmatpush1.msra.mxu0 %v608
        %1232 = vmatprep.subr.mxu0 0.0
        %1233 = vmatpush1.msra.mxu0 %v609
        %1234 = vmatprep.subr.mxu0 0.0
        %1235 = vmatpush1.msra.mxu0 %v610
        %1236 = vmatprep.subr.mxu0 0.0
        %1237 = vmatpush1.msra.mxu0 %v611
        %1238 = vmatprep.subr.mxu0 0.0
        %1239 = vmatpush1.msra.mxu0 %v612
        %1240 = vmatprep.subr.mxu0 0.0
        %1241 = vmatpush1.msra.mxu0 %v613
        %1242 = vmatprep.subr.mxu0 0.0
        %1243 = vmatpush1.msra.mxu0 %v614
        %1244 = vmatprep.subr.mxu0 0.0
        %1245 = vmatpush1.msra.mxu0 %v615
        %1246 = vmatprep.subr.mxu0 0.0
        %1247 = vmatpush1.msra.mxu0 %v616
        %1248 = vmatprep.subr.mxu0 0.0
        %1249 = vmatpush1.msra.mxu0 %v617
        %1250 = vmatprep.subr.mxu0 0.0
        %1251 = vmatpush1.msra.mxu0 %v618
        %1252 = vmatprep.subr.mxu0 0.0
        %1253 = vmatpush1.msra.mxu0 %v619
        %1254 = vmatprep.subr.mxu0 0.0
        %1255 = vmatpush1.msra.mxu0 %v620
        %1256 = vmatprep.subr.mxu0 0.0
        %1257 = vmatpush1.msra.mxu0 %v621
        %1258 = vmatprep.subr.mxu0 0.0
        %1259 = vmatpush1.msra.mxu0 %v622
        %1260 = vmatprep.subr.mxu0 0.0
        %1261 = vmatpush1.msra.mxu0 %v623
        %1262 = vmatprep.subr.mxu0 0.0
        %1263 = vmatpush1.msra.mxu0 %v624
        %1264 = vmatprep.subr.mxu0 0.0
        %1265 = vmatpush1.msra.mxu0 %v625
        %1266 = vmatprep.subr.mxu0 0.0
        %1267 = vmatpush1.msra.mxu0 %v626
        %1268 = vmatprep.subr.mxu0 0.0
        %1269 = vmatpush1.msra.mxu0 %v627
        %1270 = vmatprep.subr.mxu0 0.0
        %1271 = vmatpush1.msra.mxu0 %v628
        %1272 = vmatprep.subr.mxu0 0.0
        %1273 = vmatpush1.msra.mxu0 %v629
        %1274 = vmatprep.subr.mxu0 0.0
        %1275 = vmatpush1.msra.mxu0 %v630
        %1276 = vmatprep.subr.mxu0 0.0
        %1277 = vmatpush1.msra.mxu0 %v631
        %1278 = vmatprep.subr.mxu0 0.0
        %1279 = vmatpush1.msra.mxu0 %v632
        %1280 = vmatprep.mubr.f32.mxu0 %v709
        %1281 = vmatmul.mubr.f32.gmra.mrb[0].mxu0 %v707
        %v1282 = vpop.f32.mrb[0].mxu0
        %v1283 = vadd.f32 %v1213, %v1282
        %v1284 = vpop.f32.mrb[0].mxu0
        %1285 = vdwg.mxu0
        %v1286 = vadd.f32 %v633, %v1283
        %vm1287 = vcmask 254976
        %1288 = vst.msk [vmem:[#allocation2] sm:$0x3] %vm1287, %v1286
        %p1289 = scmp.eq.s32.totalorder %s26, 15
        // Predicated region
        $region61: #{tpu_custom_call.1} parent=55 // pred_check
          %p1290 = pneg %p1289
        $region62: #{tpu_custom_call.1} parent=55 // pred_check_branch
          %1292 = sbr.rel (%p1290) target = $region64
        $region63: #{tpu_custom_call.1} parent=55 // pred_region
          %v1293 = vld [vmem:[#allocation2] sm:$0x3]
          %v1294 = vld [vmem:[%s3] sm:$0x1]
          %v1296 = vlaneseq
          %v1297 = vshrl.u32 %v1296, 7
          %v1298 = vsub.s32 0, %v1297
          %v1299 = vrot.slane %v1294, %v1298
          %v1301 = vadd.f32 %v1293, %v1299
          %v1302 = vld [vmem:[%s4] sm:$0xff]
          %v1303 = vld [vmem:[%s4 + $0x8] sm:$0xff]
          %v1304 = vld [vmem:[%s4 + $0x10] sm:$0xff]
          %v1305 = vld [vmem:[%s4 + $0x18] sm:$0xff]
          %v1306 = vld [vmem:[%s368] sm:$0x3]
          %v1307 = vld [vmem:[%s5] sm:$0xff]
          %v1308 = vld [vmem:[%s5 + $0x8] sm:$0xff]
          %v1309 = vld [vmem:[%s5 + $0x10] sm:$0xff]
          %v1310 = vld [vmem:[%s5 + $0x18] sm:$0xff]
          %v1311 = vld [vmem:[%s5 + $0x20] sm:$0xff]
          %v1312 = vld [vmem:[%s5 + $0x28] sm:$0xff]
          %v1313 = vld [vmem:[%s5 + $0x30] sm:$0xff]
          %v1314 = vld [vmem:[%s5 + $0x38] sm:$0xff]
          %vm1315 = vcmask 523264
          %v1317 = vsel %vm1315, %v1306, 0
          %1319 = vmatprep.subr.mxu0 0.0
          %1320 = vmatpush1.msra.mxu0 %v1307
          %1321 = vmatprep.subr.mxu0 0.0
          %1322 = vmatpush1.msra.mxu0 %v1308
          %1323 = vmatprep.subr.mxu0 0.0
          %1324 = vmatpush1.msra.mxu0 %v1309
          %1325 = vmatprep.subr.mxu0 0.0
          %1326 = vmatpush1.msra.mxu0 %v1310
          %1327 = vmatprep.subr.mxu0 0.0
          %1328 = vmatpush1.msra.mxu0 %v1311
          %1329 = vmatprep.subr.mxu0 0.0
          %1330 = vmatpush1.msra.mxu0 %v1312
          %1331 = vmatprep.subr.mxu0 0.0
          %1332 = vmatpush1.msra.mxu0 %v1313
          %1333 = vmatprep.subr.mxu0 0.0
          %1334 = vmatpush1.msra.mxu0 %v1314
          %1335 = vmatprep.subr.mxu0 0.0
          %1336 = vmatpush1.msra.mxu0 0.0
          %1337 = vmatprep.subr.mxu0 0.0
          %1338 = vmatpush1.msra.mxu0 0.0
          %1339 = vmatprep.subr.mxu0 0.0
          %1340 = vmatpush1.msra.mxu0 0.0
          %1341 = vmatprep.subr.mxu0 0.0
          %1342 = vmatpush1.msra.mxu0 0.0
          %1343 = vmatprep.subr.mxu0 0.0
          %1344 = vmatpush1.msra.mxu0 0.0
          %1345 = vmatprep.subr.mxu0 0.0
          %1346 = vmatpush1.msra.mxu0 0.0
          %1347 = vmatprep.subr.mxu0 0.0
          %1348 = vmatpush1.msra.mxu0 0.0
          %1349 = vmatprep.subr.mxu0 0.0
          %1350 = vmatpush1.msra.mxu0 0.0
          %1351 = vmatprep.subr.mxu0 0.0
          %1352 = vmatpush1.msra.mxu0 0.0
          %1353 = vmatprep.subr.mxu0 0.0
          %1354 = vmatpush1.msra.mxu0 0.0
          %1355 = vmatprep.subr.mxu0 0.0
          %1356 = vmatpush1.msra.mxu0 0.0
          %1357 = vmatprep.subr.mxu0 0.0
          %1358 = vmatpush1.msra.mxu0 0.0
          %1359 = vmatprep.subr.mxu0 0.0
          %1360 = vmatpush1.msra.mxu0 0.0
          %1361 = vmatprep.subr.mxu0 0.0
          %1362 = vmatpush1.msra.mxu0 0.0
          %1363 = vmatprep.subr.mxu0 0.0
          %1364 = vmatpush1.msra.mxu0 0.0
          %1365 = vmatprep.subr.mxu0 0.0
          %1366 = vmatpush1.msra.mxu0 0.0
          %1367 = vmatprep.subr.mxu0 0.0
          %1368 = vmatpush1.msra.mxu0 0.0
          %1369 = vmatprep.subr.mxu0 0.0
          %1370 = vmatpush1.msra.mxu0 0.0
          %1371 = vmatprep.subr.mxu0 0.0
          %1372 = vmatpush1.msra.mxu0 0.0
          %1373 = vmatprep.subr.mxu0 0.0
          %1374 = vmatpush1.msra.mxu0 0.0
          %1375 = vmatprep.subr.mxu0 0.0
          %1376 = vmatpush1.msra.mxu0 0.0
          %1377 = vmatprep.subr.mxu0 0.0
          %1378 = vmatpush1.msra.mxu0 0.0
          %1379 = vmatprep.subr.mxu0 0.0
          %1380 = vmatpush1.msra.mxu0 0.0
          %1381 = vmatprep.subr.mxu0 0.0
          %1382 = vmatpush1.msra.mxu0 0.0
          %1383 = vmatprep.mubr.f32.mxu0 0.0
          %1384 = vmatmul.mubr.f32.gmra.mrb[0].mxu0 %v1317
          %v1385 = vpop.f32.mrb[0].mxu0
          %v1386 = vadd.f32 0.0, %v1385
          %v1387 = vpop.f32.mrb[0].mxu0
          %1388 = vdwg.mxu0
          %vm1389 = vcmask 261120
          %v1391 = vsel %vm1389, %v1301, 0
          %1393 = vmatprep.subr.mxu0 0.0
          %1394 = vmatpush1.msra.mxu0 %v1302
          %1395 = vmatprep.subr.mxu0 0.0
          %1396 = vmatpush1.msra.mxu0 %v1303
          %1397 = vmatprep.subr.mxu0 0.0
          %1398 = vmatpush1.msra.mxu0 %v1304
          %1399 = vmatprep.subr.mxu0 0.0
          %1400 = vmatpush1.msra.mxu0 %v1305
          %1401 = vmatprep.subr.mxu0 0.0
          %1402 = vmatpush1.msra.mxu0 0.0
          %1403 = vmatprep.subr.mxu0 0.0
          %1404 = vmatpush1.msra.mxu0 0.0
          %1405 = vmatprep.subr.mxu0 0.0
          %1406 = vmatpush1.msra.mxu0 0.0
          %1407 = vmatprep.subr.mxu0 0.0
          %1408 = vmatpush1.msra.mxu0 0.0
          %1409 = vmatprep.subr.mxu0 0.0
          %1410 = vmatpush1.msra.mxu0 0.0
          %1411 = vmatprep.subr.mxu0 0.0
          %1412 = vmatpush1.msra.mxu0 0.0
          %1413 = vmatprep.subr.mxu0 0.0
          %1414 = vmatpush1.msra.mxu0 0.0
          %1415 = vmatprep.subr.mxu0 0.0
          %1416 = vmatpush1.msra.mxu0 0.0
          %1417 = vmatprep.subr.mxu0 0.0
          %1418 = vmatpush1.msra.mxu0 0.0
          %1419 = vmatprep.subr.mxu0 0.0
          %1420 = vmatpush1.msra.mxu0 0.0
          %1421 = vmatprep.subr.mxu0 0.0
          %1422 = vmatpush1.msra.mxu0 0.0
          %1423 = vmatprep.subr.mxu0 0.0
          %1424 = vmatpush1.msra.mxu0 0.0
          %1425 = vmatprep.subr.mxu0 0.0
          %1426 = vmatpush1.msra.mxu0 0.0
          %1427 = vmatprep.subr.mxu0 0.0
          %1428 = vmatpush1.msra.mxu0 0.0
          %1429 = vmatprep.subr.mxu0 0.0
          %1430 = vmatpush1.msra.mxu0 0.0
          %1431 = vmatprep.subr.mxu0 0.0
          %1432 = vmatpush1.msra.mxu0 0.0
          %1433 = vmatprep.subr.mxu0 0.0
          %1434 = vmatpush1.msra.mxu0 0.0
          %1435 = vmatprep.subr.mxu0 0.0
          %1436 = vmatpush1.msra.mxu0 0.0
          %1437 = vmatprep.subr.mxu0 0.0
          %1438 = vmatpush1.msra.mxu0 0.0
          %1439 = vmatprep.subr.mxu0 0.0
          %1440 = vmatpush1.msra.mxu0 0.0
          %1441 = vmatprep.subr.mxu0 0.0
          %1442 = vmatpush1.msra.mxu0 0.0
          %1443 = vmatprep.subr.mxu0 0.0
          %1444 = vmatpush1.msra.mxu0 0.0
          %1445 = vmatprep.subr.mxu0 0.0
          %1446 = vmatpush1.msra.mxu0 0.0
          %1447 = vmatprep.subr.mxu0 0.0
          %1448 = vmatpush1.msra.mxu0 0.0
          %1449 = vmatprep.subr.mxu0 0.0
          %1450 = vmatpush1.msra.mxu0 0.0
          %1451 = vmatprep.subr.mxu0 0.0
          %1452 = vmatpush1.msra.mxu0 0.0
          %1453 = vmatprep.subr.mxu0 0.0
          %1454 = vmatpush1.msra.mxu0 0.0
          %1455 = vmatprep.subr.mxu0 0.0
          %1456 = vmatpush1.msra.mxu0 0.0
          %1457 = vmatprep.mubr.f32.mxu0 0.0
          %1458 = vmatmul.mubr.f32.gmra.mrb[0].mxu0 %v1391
          %v1459 = vpop.f32.mrb[0].mxu0
          %v1460 = vadd.f32 %v1386, %v1459
          %v1461 = vpop.f32.mrb[0].mxu0
          %1462 = vdwg.mxu0
          %v1463 = vld [vmem:[%s6] sm:$0x1]
          %v1465 = vlaneseq
          %v1466 = vshrl.u32 %v1465, 7
          %v1467 = vsub.s32 0, %v1466
          %v1468 = vrot.slane %v1463, %v1467
          %v1470 = vadd.f32 %v1460, %v1468
          %v1471 = vmax.f32 %v1470, 0.0
          %v1472 = vld [vmem:[%s7] sm:$0xff]
          %v1473 = vld [vmem:[%s7 + $0x8] sm:$0xff]
          %v1474 = vld [vmem:[%s7 + $0x10] sm:$0xff]
          %v1475 = vld [vmem:[%s7 + $0x18] sm:$0xff]
          %v1476 = vld [vmem:[%s7 + $0x20] sm:$0xff]
          %v1477 = vld [vmem:[%s7 + $0x28] sm:$0xff]
          %v1478 = vld [vmem:[%s7 + $0x30] sm:$0xff]
          %v1479 = vld [vmem:[%s7 + $0x38] sm:$0xff]
          %v1480 = vld [vmem:[%s7 + $0x40] sm:$0xff]
          %v1481 = vld [vmem:[%s7 + $0x48] sm:$0xff]
          %v1482 = vld [vmem:[%s7 + $0x50] sm:$0xff]
          %v1483 = vld [vmem:[%s7 + $0x58] sm:$0xff]
          %v1484 = vld [vmem:[%s8] sm:$0x1]
          %v1486 = vlaneseq
          %v1487 = vshrl.u32 %v1486, 7
          %v1488 = vsub.s32 0, %v1487
          %v1489 = vrot.slane %v1484, %v1488
          %vm1491 = vcmask 785408
          %v1493 = vsel %vm1491, %v1471, 0
          %1495 = vmatprep.subr.mxu0 0.0
          %1496 = vmatpush1.msra.mxu0 %v1472
          %1497 = vmatprep.subr.mxu0 0.0
          %1498 = vmatpush1.msra.mxu0 %v1473
          %1499 = vmatprep.subr.mxu0 0.0
          %1500 = vmatpush1.msra.mxu0 %v1474
          %1501 = vmatprep.subr.mxu0 0.0
          %1502 = vmatpush1.msra.mxu0 %v1475
          %1503 = vmatprep.subr.mxu0 0.0
          %1504 = vmatpush1.msra.mxu0 %v1476
          %1505 = vmatprep.subr.mxu0 0.0
          %1506 = vmatpush1.msra.mxu0 %v1477
          %1507 = vmatprep.subr.mxu0 0.0
          %1508 = vmatpush1.msra.mxu0 %v1478
          %1509 = vmatprep.subr.mxu0 0.0
          %1510 = vmatpush1.msra.mxu0 %v1479
          %1511 = vmatprep.subr.mxu0 0.0
          %1512 = vmatpush1.msra.mxu0 %v1480
          %1513 = vmatprep.subr.mxu0 0.0
          %1514 = vmatpush1.msra.mxu0 %v1481
          %1515 = vmatprep.subr.mxu0 0.0
          %1516 = vmatpush1.msra.mxu0 %v1482
          %1517 = vmatprep.subr.mxu0 0.0
          %1518 = vmatpush1.msra.mxu0 %v1483
          %1519 = vmatprep.subr.mxu0 0.0
          %1520 = vmatpush1.msra.mxu0 0.0
          %1521 = vmatprep.subr.mxu0 0.0
          %1522 = vmatpush1.msra.mxu0 0.0
          %1523 = vmatprep.subr.mxu0 0.0
          %1524 = vmatpush1.msra.mxu0 0.0
          %1525 = vmatprep.subr.mxu0 0.0
          %1526 = vmatpush1.msra.mxu0 0.0
          %1527 = vmatprep.subr.mxu0 0.0
          %1528 = vmatpush1.msra.mxu0 0.0
          %1529 = vmatprep.subr.mxu0 0.0
          %1530 = vmatpush1.msra.mxu0 0.0
          %1531 = vmatprep.subr.mxu0 0.0
          %1532 = vmatpush1.msra.mxu0 0.0
          %1533 = vmatprep.subr.mxu0 0.0
          %1534 = vmatpush1.msra.mxu0 0.0
          %1535 = vmatprep.subr.mxu0 0.0
          %1536 = vmatpush1.msra.mxu0 0.0
          %1537 = vmatprep.subr.mxu0 0.0
          %1538 = vmatpush1.msra.mxu0 0.0
          %1539 = vmatprep.subr.mxu0 0.0
          %1540 = vmatpush1.msra.mxu0 0.0
          %1541 = vmatprep.subr.mxu0 0.0
          %1542 = vmatpush1.msra.mxu0 0.0
          %1543 = vmatprep.subr.mxu0 0.0
          %1544 = vmatpush1.msra.mxu0 0.0
          %1545 = vmatprep.subr.mxu0 0.0
          %1546 = vmatpush1.msra.mxu0 0.0
          %1547 = vmatprep.subr.mxu0 0.0
          %1548 = vmatpush1.msra.mxu0 0.0
          %1549 = vmatprep.subr.mxu0 0.0
          %1550 = vmatpush1.msra.mxu0 0.0
          %1551 = vmatprep.subr.mxu0 0.0
          %1552 = vmatpush1.msra.mxu0 0.0
          %1553 = vmatprep.subr.mxu0 0.0
          %1554 = vmatpush1.msra.mxu0 0.0
          %1555 = vmatprep.subr.mxu0 0.0
          %1556 = vmatpush1.msra.mxu0 0.0
          %1557 = vmatprep.subr.mxu0 0.0
          %1558 = vmatpush1.msra.mxu0 0.0
          %1559 = vmatprep.mubr.f32.mxu0 0.0
          %1560 = vmatmul.mubr.f32.gmra.mrb[0].mxu0 %v1493
          %v1561 = vpop.f32.mrb[0].mxu0
          %v1562 = vadd.f32 %v1489, %v1561
          %v1563 = vpop.f32.mrb[0].mxu0
          %1564 = vdwg.mxu0
          %1565 = vst.msk [vmem:[#allocation3] sm:$0x3] %vm1287, %v1562
        $region64: #{tpu_custom_call.1} parent=55 // pred_fallthru
          _
        // Predicated region
        $region65: #{tpu_custom_call.1} parent=55 // pred_check
          %p1566 = pneg %p252
        $region66: #{tpu_custom_call.1} parent=55 // pred_check_branch
          %1568 = sbr.rel (%p1566) target = $region68
        $region67: #{tpu_custom_call.1} parent=55 // pred_region
          %s1570 = ssub.s32 32, 32
          %1571 = vsyncadd [#allocation4], %s1570
          %s1572 = smul.addr %s25, 32
          %s1573 = scalar_lea.hbm %s9, %s1572
          %s1575 = sshll.u32 [#allocation3], 4
          %s1576 = int_to_ptr.vmem [resolvable:$true] %s1575
          %1578 = dma.vmem_to_hbm [thread:$0]  %s1576, 32, %s1573, [#allocation4]
        $region68: #{tpu_custom_call.1} parent=55 // pred_fallthru
          _
        // Predicated region
        $region69: #{tpu_custom_call.1} parent=55 // pred_check
          %p1579 = pneg %p252
        $region70: #{tpu_custom_call.1} parent=55 // pred_check_branch
          %1581 = sbr.rel (%p1579) target = $region72
        $region71: #{tpu_custom_call.1} parent=55 // pred_region
          %1582 = dma.done [#allocation4], 32
        $region72: #{tpu_custom_call.1} parent=55 // pred_fallthru
          _
      $region56: #{tpu_custom_call.1} parent=5 // pred_fallthru
        _
      %p1583 = scmp.le.s32.totalorder 2, %s16
      // Predicated region
      $region73: #{tpu_custom_call.1} parent=5 // pred_check
        %p1584 = pneg %p1583
      $region74: #{tpu_custom_call.1} parent=5 // pred_check_branch
        %1586 = sbr.rel (%p1584) target = $region76
      $region75: #{tpu_custom_call.1} parent=5 // pred_region
        %s1587 = ssub.s32 %s16, 2
      $region76: #{tpu_custom_call.1} parent=5 // pred_fallthru
        _
    $region6: #{tpu_custom_call.1} parent=1 // loop_footer
      %s20 = sadd.s32 1, %s16
    $region7: #{tpu_custom_call.1} parent=1 // loop_footer_branch
      %15 = sbr.rel target = $region3
    $region8: #{tpu_custom_call.1} parent=1 // loop_exit
      _
    %1588 = vsyncpa [#allocation4], 1
    %s1589 = scalar_lea.sflag [#allocation4], 1
    %1590 = vsyncpa %s1589, 1

</llo_original>
